<compile_context>
chip_gen: v7x
topology: tpu7x:2x2x1
jax: 0.10.0
libtpu: 0.0.40
codegen_flags: <defaults>
</compile_context>

<pallas_src>
import functools

import jax
import jax.numpy as jnp
from jax.experimental import pallas as pl
from jax.experimental.pallas import tpu as pltpu


# ---------------------------------------------------------------------------
# Kernel body: one MXU matmul + f32 bias add per (tm, 3g) x (3g, gE) tile.
# ---------------------------------------------------------------------------
def _embed_kernel(x_ref, w_ref, b_ref, o_ref):
    # x_ref: (tm, 3g), w_ref: (3g, gE), b_ref: (1, gE), o_ref: (tm, gE)
    x = x_ref[...].astype(w_ref.dtype)          # no-op for f32; bf16 MXU path opt-in
    acc = jnp.dot(x, w_ref[...], preferred_element_type=jnp.float32)
    o_ref[...] = (acc + b_ref[...]).astype(o_ref.dtype)


# ---------------------------------------------------------------------------
# Static tiling heuristics (plain Python, evaluated outside the jitted path).
# ---------------------------------------------------------------------------
def _mxu_k_depth():
    """Native MXU K depth: 128 on v5e and earlier, 256 on v6e/v7x."""
    try:
        kind = jax.devices()[0].device_kind.lower()
    except Exception:
        return 128
    if any(tag in kind for tag in ("v6", "v7", "7x")):
        return 256
    return 128


def _choose_group(N, E, itemsize, max_kg):
    """Largest g | N with 3g inside one MXU K-pass and a <=2 MiB block-diagonal
    weight, preferring lane-dense outputs (g*E multiple of 128)."""
    max_g = max(1, min(max_kg // 3, 128))
    cands = [g for g in range(max_g, 0, -1)
             if N % g == 0 and 3 * g * g * E * itemsize <= 2 * 1024 * 1024]
    for g in cands:
        if (g * E) % 128 == 0:
            return g
    # Fallback: still correct, but lane-masked stores / narrow-K matmul.
    return cands[0] if cands else 1


def _choose_row_tile(R, gE, out_itemsize, tm):
    """Row tile: multiple of 8 (or == R), ~8 MiB output block, >=2 grid steps
    when possible (v7x dual TensorCores), divisor of R preferred (no ragged
    last tile -> unmasked vst)."""
    if R <= 8:
        return R
    if tm is not None:
        t = max(8, (min(tm, R) // 8) * 8)       # round user tile down to x8
    else:
        t = (8 * 1024 * 1024) // max(1, gE * out_itemsize)
        t = max(8, min(4096, (t // 8) * 8))
        t = min(t, R)
        if pl.cdiv(R, t) < 2:                   # keep both TCs busy on v7x
            t = max(8, ((R + 1) // 2 + 7) // 8 * 8)
            t = min(t, R)
    # Prefer an exact divisor of R if one exists without shrinking the tile
    # by more than ~2x (avoids masked partial stores on the last tile).
    if t % 8 == 0 and R % 8 == 0 and R % t != 0:
        for cand in range(t, max(7, t // 2 - 1), -8):
            if R % cand == 0:
                t = cand
                break
    return t


def _const_spec(block_shape, index_map, single_buffer):
    """BlockSpec for a grid-constant operand; single-buffered when supported."""
    if single_buffer:
        try:
            return pl.BlockSpec(block_shape, index_map,
                                pipeline_mode=pl.Buffered(1))
        except (TypeError, AttributeError):
            pass
    return pl.BlockSpec(block_shape, index_map)


# ---------------------------------------------------------------------------
# Jitted apply: all tiling decisions arrive as static ints / dtypes.
# ---------------------------------------------------------------------------
@functools.partial(
    jax.jit,
    static_argnames=("g", "tm", "out_dtype", "single_buffer", "vmem_limit"))
def _cifar_embed_apply(x, w_bd, b_g, *, g, tm, out_dtype, single_buffer,
                       vmem_limit):
    B = x.shape[0]
    Kg, Ng = w_bd.shape
    E = Ng // g

    x3 = x.reshape(B, -1, 3)                    # matches torch .view
    N = x3.shape[1]
    R = (B * N) // g
    x2d = x3.reshape(R, Kg)                     # metadata-only: contiguous rows

    grid = (pl.cdiv(R, tm),)
    out2d = pl.pallas_call(
        _embed_kernel,
        out_shape=jax.ShapeDtypeStruct((R, Ng), out_dtype),
        grid_spec=pl.GridSpec(
            grid=grid,
            in_specs=[
                pl.BlockSpec((tm, Kg), lambda i: (i, 0)),
                _const_spec((Kg, Ng), lambda i: (0, 0), single_buffer),
                _const_spec((1, Ng), lambda i: (0, 0), single_buffer),
            ],
            out_specs=pl.BlockSpec((tm, Ng), lambda i: (i, 0)),
        ),
        compiler_params=pltpu.CompilerParams(
            dimension_semantics=("parallel",),
            vmem_limit_bytes=vmem_limit),
    )(x2d, w_bd, b_g)

    return out2d.reshape(B, N, E)               # metadata-only reshape


# ---------------------------------------------------------------------------
# Module-like wrapper: holds params, caches the grouped (block-diagonal)
# weight/bias so they are NOT rebuilt on every call.
# ---------------------------------------------------------------------------
class CIFARColoredEmbedding:
    """Pallas-TPU port of fairseq's CIFARColoredEmbedding (Linear(3, E))."""

    def __init__(self, embedding_dim, *, weight=None, bias=None, key=None):
        self.embedding_dim = int(embedding_dim)
        if weight is None or bias is None:
            if key is None:
                key = jax.random.PRNGKey(0)
            kw, kb = jax.random.split(key)
            if weight is None:
                # reset_parameters(): nn.init.normal_(weight, mean=0, std=1)
                weight = jax.random.normal(kw, (self.embedding_dim, 3),
                                           dtype=jnp.float32)
            if bias is None:
                # nn.Linear default bias init: U(-1/sqrt(fan_in), 1/sqrt(fan_in))
                bound = 1.0 / (3.0 ** 0.5)
                bias = jax.random.uniform(kb, (self.embedding_dim,),
                                          dtype=jnp.float32,
                                          minval=-bound, maxval=bound)
        self.weight = jnp.asarray(weight)       # (E, 3), PyTorch Linear layout
        self.bias = jnp.asarray(bias)           # (E,)
        self._max_kg = _mxu_k_depth()
        self._param_cache = {}                  # (g, dtype) -> (w_bd, b_g)
        self._single_buffer = None              # decided on first call

    def _grouped_params(self, g, mm_dtype):
        """Block-diagonal weight / tiled bias, built once per (g, dtype)."""
        key = (int(g), jnp.dtype(mm_dtype).name)
        if key not in self._param_cache:
            E = self.embedding_dim
            w_t = self.weight.T.astype(mm_dtype)             # (3, E)
            eye = jnp.eye(g, dtype=mm_dtype)
            # W_bd[j*3 + k, j*E + e] = W.T[k, e]; zeros elsewhere.
            # NOTE: the explicit zeros mean an Inf/NaN pixel contaminates the
            # other g-1 pixels of its slab row (0*Inf=NaN); exact for finite x.
            w_bd = (eye[:, None, :, None] * w_t[None, :, None, :]
                    ).reshape(3 * g, g * E)
            b_g = jnp.tile(self.bias.astype(jnp.float32), g).reshape(1, g * E)
            self._param_cache[key] = (w_bd, b_g)
        return self._param_cache[key]

    def __call__(self, x, *, tm=None, g=None, out_dtype=None,
                 matmul_dtype=None):
        B = x.shape[0]
        E = self.embedding_dim
        numel = int(x.size)
        assert numel % (B * 3) == 0, "numel must be divisible by 3 per example"
        N = numel // (B * 3)

        in_itemsize = jnp.dtype(x.dtype).itemsize
        out_dtype = jnp.dtype(x.dtype if out_dtype is None else out_dtype)
        mm_dtype = jnp.dtype(x.dtype if matmul_dtype is None else matmul_dtype)
        out_itemsize = out_dtype.itemsize

        if g is None:
            g = _choose_group(N, E, in_itemsize, self._max_kg)
        g = int(g)
        assert N % g == 0, "group size must divide the pixel count"

        w_bd, b_g = self._grouped_params(g, mm_dtype)

        Kg, Ng = 3 * g, g * E
        R = (B * N) // g
        tm_eff = int(_choose_row_tile(R, Ng, out_itemsize, tm))

        # Worst-case VMEM budget (everything double-buffered) + margin; kept
        # under 48 MiB so it is valid on every generation (v7x: 64 MiB VMEM),
        # and at least 32 MiB so v5e's 16 MiB scoped default never binds.
        vmem_bytes = (2 * tm_eff * Kg * in_itemsize
                      + 2 * tm_eff * Ng * out_itemsize
                      + 2 * (Kg * Ng + Ng) * jnp.dtype(mm_dtype).itemsize
                      + (1 << 20))
        vmem_limit = int(min(max(2 * vmem_bytes, 32 << 20), 48 << 20))

        def run(single_buffer):
            return _cifar_embed_apply(
                x, w_bd, b_g, g=g, tm=tm_eff, out_dtype=out_dtype,
                single_buffer=single_buffer, vmem_limit=vmem_limit)

        if self._single_buffer is None:
            try:
                out = run(True)
                self._single_buffer = True
            except Exception:
                # pl.Buffered(1) not supported by this jax/Mosaic build; fall
                # back to default double-buffered grid-constant weight/bias.
                self._single_buffer = False
                out = run(False)
        else:
            out = run(self._single_buffer)
        return out


if __name__ == "__main__":
    key = jax.random.PRNGKey(0)
    k_x, k_w, k_b, k_x2 = jax.random.split(key, 4)

    # CIFAR-like small input: (B=2, C=3, H=16, W=16) -> view(B, -1, 3) -> (2, 256, 3)
    B, C, H, W = 2, 3, 16, 16
    embedding_dim = 32

    x = jax.random.normal(k_x, (B, C, H, W), dtype=jnp.float32)
    weight = jax.random.normal(k_w, (embedding_dim, 3), dtype=jnp.float32)
    bound = 1.0 / jnp.sqrt(3.0)
    bias = jax.random.uniform(k_b, (embedding_dim,), dtype=jnp.float32,
                              minval=-bound, maxval=bound)

    module = CIFARColoredEmbedding(embedding_dim, weight=weight, bias=bias)

    # Main path (f32 in / f32 out), exact vs. plain-JAX reference.
    out = jax.block_until_ready(module(x))
    ref = x.reshape(B, -1, 3) @ weight.T + bias
    assert out.shape == (B, (C * H * W) // 3, embedding_dim)
    assert jnp.allclose(out, ref, atol=1e-5, rtol=1e-5)

    # Shape whose row count is not a multiple of the tile -> exercises the
    # masked ragged last tile.
    x2 = jax.random.normal(k_x2, (2, 3, 20, 18), dtype=jnp.float32)
    out2 = jax.block_until_ready(module(x2))
    ref2 = x2.reshape(2, -1, 3) @ weight.T + bias
    assert out2.shape == (2, (3 * 20 * 18) // 3, embedding_dim)
    assert jnp.allclose(out2, ref2, atol=1e-5, rtol=1e-5)

    # Optional bf16 output path (halves the dominant HBM stream downstream).
    out_bf16 = jax.block_until_ready(module(x, out_dtype=jnp.bfloat16))
    assert out_bf16.dtype == jnp.bfloat16
    assert jnp.allclose(out_bf16.astype(jnp.float32), ref, atol=1e-1, rtol=1e-1)

    print("KERNEL_OK")
</pallas_src>

<mosaic_0001>
module attributes {stable_mosaic.version = 11 : i64} {
  func.func @_embed_kernel(%arg0: i32, %arg1: memref<8x96xf32, #tpu.memory_space<vmem>>, %arg2: memref<96x1024xf32, #tpu.memory_space<vmem>>, %arg3: memref<1x1024xf32, #tpu.memory_space<vmem>>, %arg4: memref<8x1024xf32, #tpu.memory_space<vmem>>) attributes {dimension_semantics = [#tpu.dimension_semantics<parallel>], iteration_bounds = array<i64: 2>, scalar_prefetch = 0 : i64, scratch_operands = 0 : i64, tpu.core_type = #tpu.core_type<tc>, window_params = [{transform_indices = @transform_0, window_bounds = array<i64: 8, 96>}, {pipeline_mode = #tpu.pipeline_mode<synchronous>, transform_indices = @transform_1, window_bounds = array<i64: 96, 1024>}, {pipeline_mode = #tpu.pipeline_mode<synchronous>, transform_indices = @transform_2, window_bounds = array<i64: 1, 1024>}, {transform_indices = @transform_3, window_bounds = array<i64: 8, 1024>}]} {
    %c0 = arith.constant 0 : index
    %c0_0 = arith.constant 0 : index
    %0 = vector.load %arg1[%c0, %c0_0] : memref<8x96xf32, #tpu.memory_space<vmem>>, vector<8x96xf32>
    %c0_1 = arith.constant 0 : index
    %c0_2 = arith.constant 0 : index
    %1 = vector.load %arg2[%c0_1, %c0_2] : memref<96x1024xf32, #tpu.memory_space<vmem>>, vector<96x1024xf32>
    %cst = arith.constant dense<0.000000e+00> : vector<8x1024xf32>
    %2 = tpu.matmul %0, %1, %cst {dimension_numbers = #tpu.dot_dimension_numbers<[1], [0], [0], [1], [0, 0, 1, 1], [], []>} : vector<8x96xf32>, vector<96x1024xf32>, vector<8x1024xf32> -> vector<8x1024xf32>
    %c0_3 = arith.constant 0 : index
    %c0_4 = arith.constant 0 : index
    %3 = vector.load %arg3[%c0_3, %c0_4] : memref<1x1024xf32, #tpu.memory_space<vmem>>, vector<1x1024xf32>
    %4 = vector.broadcast %3 : vector<1x1024xf32> to vector<8x1024xf32>
    %5 = arith.addf %2, %4 : vector<8x1024xf32>
    %c0_5 = arith.constant 0 : index
    %c0_6 = arith.constant 0 : index
    %6 = vector.load %arg4[%c0_5, %c0_6] : memref<8x1024xf32, #tpu.memory_space<vmem>>, vector<8x1024xf32>
    tpu.vector_store %arg4[%c0_5, %c0_6], %5 {strides = array<i32>} : memref<8x1024xf32, #tpu.memory_space<vmem>>, vector<8x1024xf32>,
    return
  }
  func.func @transform_0(%arg0: i32) -> (i32, i32) {
    %c0_i32 = arith.constant 0 : i32
    %c0_i32_0 = arith.constant 0 : i32
    return %arg0, %c0_i32 : i32, i32
  }
  func.func @transform_1(%arg0: i32) -> (i32, i32) {
    %c0_i32 = arith.constant 0 : i32
    %c0_i32_0 = arith.constant 0 : i32
    %c0_i32_1 = arith.constant 0 : i32
    return %c0_i32, %c0_i32_0 : i32, i32
  }
  func.func @transform_2(%arg0: i32) -> (i32, i32) {
    %c0_i32 = arith.constant 0 : i32
    %c0_i32_0 = arith.constant 0 : i32
    %c0_i32_1 = arith.constant 0 : i32
    return %c0_i32, %c0_i32_0 : i32, i32
  }
  func.func @transform_3(%arg0: i32) -> (i32, i32) {
    %c0_i32 = arith.constant 0 : i32
    %c0_i32_0 = arith.constant 0 : i32
    return %arg0, %c0_i32 : i32, i32
  }
}

module attributes {stable_mosaic.version = 11 : i64} {
  func.func @_embed_kernel(%arg0: i32, %arg1: memref<8x96xf32, #tpu.memory_space<vmem>>, %arg2: memref<96x1024xf32, #tpu.memory_space<vmem>>, %arg3: memref<1x1024xf32, #tpu.memory_space<vmem>>, %arg4: memref<8x1024xf32, #tpu.memory_space<vmem>>) attributes {dimension_semantics = [#tpu.dimension_semantics<parallel>], iteration_bounds = array<i64: 2>, scalar_prefetch = 0 : i64, scratch_operands = 0 : i64, tpu.core_type = #tpu.core_type<tc>, window_params = [{transform_indices = @transform_0, window_bounds = array<i64: 8, 96>}, {pipeline_mode = #tpu.pipeline_mode<synchronous>, transform_indices = @transform_1, window_bounds = array<i64: 96, 1024>}, {pipeline_mode = #tpu.pipeline_mode<synchronous>, transform_indices = @transform_2, window_bounds = array<i64: 1, 1024>}, {transform_indices = @transform_3, window_bounds = array<i64: 8, 1024>}]} {
    %c0 = arith.constant 0 : index
    %c0_0 = arith.constant 0 : index
    %0 = vector.load %arg1[%c0, %c0_0] : memref<8x96xf32, #tpu.memory_space<vmem>>, vector<8x96xf32>
    %c0_1 = arith.constant 0 : index
    %c0_2 = arith.constant 0 : index
    %1 = vector.load %arg2[%c0_1, %c0_2] : memref<96x1024xf32, #tpu.memory_space<vmem>>, vector<96x1024xf32>
    %cst = arith.constant dense<0.000000e+00> : vector<8x1024xf32>
    %2 = tpu.matmul %0, %1, %cst {dimension_numbers = #tpu.dot_dimension_numbers<[1], [0], [0], [1], [0, 0, 1, 1], [], []>} : vector<8x96xf32>, vector<96x1024xf32>, vector<8x1024xf32> -> vector<8x1024xf32>
    %c0_3 = arith.constant 0 : index
    %c0_4 = arith.constant 0 : index
    %3 = vector.load %arg3[%c0_3, %c0_4] : memref<1x1024xf32, #tpu.memory_space<vmem>>, vector<1x1024xf32>
    %4 = vector.broadcast %3 : vector<1x1024xf32> to vector<8x1024xf32>
    %5 = arith.addf %2, %4 : vector<8x1024xf32>
    %c0_5 = arith.constant 0 : index
    %c0_6 = arith.constant 0 : index
    %6 = vector.load %arg4[%c0_5, %c0_6] : memref<8x1024xf32, #tpu.memory_space<vmem>>, vector<8x1024xf32>
    tpu.vector_store %arg4[%c0_5, %c0_6], %5 {strides = array<i32>} : memref<8x1024xf32, #tpu.memory_space<vmem>>, vector<8x1024xf32>,
    return
  }
  func.func @transform_0(%arg0: i32) -> (i32, i32) {
    %c0_i32 = arith.constant 0 : i32
    %c0_i32_0 = arith.constant 0 : i32
    return %arg0, %c0_i32 : i32, i32
  }
  func.func @transform_1(%arg0: i32) -> (i32, i32) {
    %c0_i32 = arith.constant 0 : i32
    %c0_i32_0 = arith.constant 0 : i32
    %c0_i32_1 = arith.constant 0 : i32
    return %c0_i32, %c0_i32_0 : i32, i32
  }
  func.func @transform_2(%arg0: i32) -> (i32, i32) {
    %c0_i32 = arith.constant 0 : i32
    %c0_i32_0 = arith.constant 0 : i32
    %c0_i32_1 = arith.constant 0 : i32
    return %c0_i32, %c0_i32_0 : i32, i32
  }
  func.func @transform_3(%arg0: i32) -> (i32, i32) {
    %c0_i32 = arith.constant 0 : i32
    %c0_i32_0 = arith.constant 0 : i32
    return %arg0, %c0_i32 : i32, i32
  }
}

</mosaic_0001>

<llo_original>
// kernel: _cifar_embed_apply.1
$region0: #{_cifar_embed_apply.1}
  #allocation0 [shape = 'u32[]', space=smem, size = 0x4, offset = 0x4, fixed_abs, tag = 'smem constant byte address 0x4 - core index']
  #allocation1 [shape = 'u32[144,128]{1,0:T(1,128)}', space=vmem, size = 0x12000, scoped, tag = 'internal scratch']
  %s0 = inlined_call_operand.vmem [shape: f32[16,96], index: 0, kind: input, shape index: {}]
  %s1 = inlined_call_operand.hbm [shape: f32[96,1024], index: 1, kind: input, shape index: {}]
  %s2 = inlined_call_operand.vmem [shape: f32[1,1024], index: 2, kind: input, shape index: {}]
  %s3 = inlined_call_operand.vmem [shape: f32[16,1024], index: 3, kind: output, shape index: {}]
  %s4 = sld [smem:[#allocation0]]
  $region49: #{_cifar_embed_apply.1} parent=0
    _
  %s6 = ssub.s32 1, %s4
  %s7 = scalar_select 0, %s6, %s4
  $region1: #{_cifar_embed_apply.1} parent=0
    #allocation2 [shape = 'u8[393216]{0}', space=vmem, size = 0x60000, scoped, tag = 'input window, operand 1, single buffered']
    #allocation3 [shape = 's32[2]{0}', space=sflag, size = 0x8, scoped, tag = 'scoped memory for _cifar_embed_apply.1']
    %8 = vsyncpa [#allocation3], 0
    loop: start=0, step=1, limit=4
    $region2: #{_cifar_embed_apply.1} parent=1 // loop_pre_header
      _
    $region3: #{_cifar_embed_apply.1} parent=1 // loop_header
      %s10 = sphi 0, %s14
      %p11 = scmp.ge.s32.totalorder %s10, 4
      %s20 = sphi 0, %s22
      %s23 = sphi 0, %s20
      %s24 = sphi 0, %s23
      %s40 = sphi 0, %s24
      %s44 = sphi 0, %s44
      %s46 = sphi 0, %s44
      %s47 = sphi 0, %s46
      %s61 = sphi 0, %s47
      %s65 = sphi 0, %s65
      %s67 = sphi 0, %s65
      %s68 = sphi 0, %s67
      %s82 = sphi 0, %s68
      %s88 = sphi 0, %s90
      %s91 = sphi 0, %s88
      %s92 = sphi 0, %s91
      %s108 = sphi 0, %s92
    $region4: #{_cifar_embed_apply.1} parent=1 // loop_header_branch
      %13 = sbr.rel (%p11) target = $region8
    $region5: #{_cifar_embed_apply.1} parent=1 // loop_body
      %s15 = ssub.s32 %s10, 1
      %s16 = ssub.s32 %s10, 2
      %s17 = sadd.s32 %s10, 1
      %s18 = ssub.s32 %s10, %s17
      %p19 = scmp.eq.s32.totalorder %s18, 0
      %s21 = sadd.s32 %s20, 1
      %s22 = scalar_select %p19, %s20, %s21
      %p25 = pneg %p19
      %p26 = scmp.eq.s32.totalorder %s10, 1
      %p27 = por %p25, %p26
      %p28 = scmp.ne.s32.totalorder %s20, %s23
      %p29 = scmp.eq.s32.totalorder %s10, 0
      %p30 = por %p28, %p29
      %p31 = scmp.ne.s32.totalorder %s20, %s23
      %p32 = scmp.eq.s32.totalorder %s15, 1
      %p33 = por %p31, %p32
      %p34 = scmp.ne.s32.totalorder %s23, %s24
      %p35 = scmp.eq.s32.totalorder %s15, 0
      %p36 = por %p34, %p35
      %p37 = scmp.ne.s32.totalorder %s23, %s24
      %p38 = scmp.eq.s32.totalorder %s16, 1
      %p39 = por %p37, %p38
      %p41 = scmp.ne.s32.totalorder %s24, %s40
      %p42 = scmp.eq.s32.totalorder %s16, 0
      %p43 = por %p41, %p42
      %s45 = sadd.s32 %s44, 1
      %p48 = scmp.eq.s32.totalorder %s10, 1
      %p49 = scmp.ne.s32.totalorder %s44, %s46
      %p50 = scmp.eq.s32.totalorder %s10, 0
      %p51 = por %p49, %p50
      %p52 = scmp.ne.s32.totalorder %s44, %s46
      %p53 = scmp.eq.s32.totalorder %s15, 1
      %p54 = por %p52, %p53
      %p55 = scmp.ne.s32.totalorder %s46, %s47
      %p56 = scmp.eq.s32.totalorder %s15, 0
      %p57 = por %p55, %p56
      %p58 = scmp.ne.s32.totalorder %s46, %s47
      %p59 = scmp.eq.s32.totalorder %s16, 1
      %p60 = por %p58, %p59
      %p62 = scmp.ne.s32.totalorder %s47, %s61
      %p63 = scmp.eq.s32.totalorder %s16, 0
      %p64 = por %p62, %p63
      %s66 = sadd.s32 %s65, 1
      %p69 = scmp.eq.s32.totalorder %s10, 1
      %p70 = scmp.ne.s32.totalorder %s65, %s67
      %p71 = scmp.eq.s32.totalorder %s10, 0
      %p72 = por %p70, %p71
      %p73 = scmp.ne.s32.totalorder %s65, %s67
      %p74 = scmp.eq.s32.totalorder %s15, 1
      %p75 = por %p73, %p74
      %p76 = scmp.ne.s32.totalorder %s67, %s68
      %p77 = scmp.eq.s32.totalorder %s15, 0
      %p78 = por %p76, %p77
      %p79 = scmp.ne.s32.totalorder %s67, %s68
      %p80 = scmp.eq.s32.totalorder %s16, 1
      %p81 = por %p79, %p80
      %p83 = scmp.ne.s32.totalorder %s68, %s82
      %p84 = scmp.eq.s32.totalorder %s16, 0
      %p85 = por %p83, %p84
      %s86 = ssub.s32 %s10, %s17
      %p87 = scmp.eq.s32.totalorder %s86, 0
      %s89 = sadd.s32 %s88, 1
      %s90 = scalar_select %p87, %s88, %s89
      %p93 = pneg %p87
      %p94 = scmp.eq.s32.totalorder %s10, 1
      %p95 = por %p93, %p94
      %p96 = scmp.ne.s32.totalorder %s88, %s91
      %p97 = scmp.eq.s32.totalorder %s10, 0
      %p98 = por %p96, %p97
      %p99 = scmp.ne.s32.totalorder %s88, %s91
      %p100 = scmp.eq.s32.totalorder %s15, 1
      %p101 = por %p99, %p100
      %p102 = scmp.ne.s32.totalorder %s91, %s92
      %p103 = scmp.eq.s32.totalorder %s15, 0
      %p104 = por %p102, %p103
      %p105 = scmp.ne.s32.totalorder %s91, %s92
      %p106 = scmp.eq.s32.totalorder %s16, 1
      %p107 = por %p105, %p106
      %p109 = scmp.ne.s32.totalorder %s92, %s108
      %p110 = scmp.eq.s32.totalorder %s16, 0
      %p111 = por %p109, %p110
      %p112 = scmp.le.s32.totalorder 1, %s10
      %p113 = scmp.lt.s32.totalorder %s10, 3
      %p114 = pnand %p112, %p113
      %p115 = pneg %p114
      // Predicated region
      $region9: #{_cifar_embed_apply.1} parent=5 // pred_check
        _
      $region10: #{_cifar_embed_apply.1} parent=5 // pred_check_branch
        %117 = sbr.rel (%p114) target = $region12
      $region11: #{_cifar_embed_apply.1} parent=5 // pred_region
        %s118 = ssub.s32 %s10, 1
        // Predicated region
        $region13: #{_cifar_embed_apply.1} parent=11 // pred_check
          %p119 = pneg %p57
        $region14: #{_cifar_embed_apply.1} parent=11 // pred_check_branch
          %121 = sbr.rel (%p119) target = $region16
        $region15: #{_cifar_embed_apply.1} parent=11 // pred_region
          %s123 = ssub.s32 12288, 12288
          %124 = vsyncadd [#allocation3], %s123
          %s125 = sshll.u32 [#allocation2], 4
          %s126 = int_to_ptr.vmem [resolvable:$true] %s125
          %131 = dma.hbm_to_vmem [thread:$0]  %s1, 12288, %s126, [#allocation3], 1024, 1024, 64
        $region16: #{_cifar_embed_apply.1} parent=11 // pred_fallthru
          _
        // Predicated region
        $region17: #{_cifar_embed_apply.1} parent=11 // pred_check
          %p132 = pneg %p78
        $region18: #{_cifar_embed_apply.1} parent=11 // pred_check_branch
          %134 = sbr.rel (%p132) target = $region20
        $region19: #{_cifar_embed_apply.1} parent=11 // pred_region
          _
        $region20: #{_cifar_embed_apply.1} parent=11 // pred_fallthru
          _
      $region12: #{_cifar_embed_apply.1} parent=5 // pred_fallthru
        _
      %p135 = scmp.lt.s32.totalorder %s10, 2
      // Predicated region
      $region21: #{_cifar_embed_apply.1} parent=5 // pred_check
        %p136 = pneg %p135
      $region22: #{_cifar_embed_apply.1} parent=5 // pred_check_branch
        %138 = sbr.rel (%p136) target = $region24
      $region23: #{_cifar_embed_apply.1} parent=5 // pred_region
        // Predicated region
        $region25: #{_cifar_embed_apply.1} parent=23 // pred_check
          %p139 = pneg %p30
        $region26: #{_cifar_embed_apply.1} parent=23 // pred_check_branch
          %141 = sbr.rel (%p139) target = $region28
        $region27: #{_cifar_embed_apply.1} parent=23 // pred_region
          %p142 = scmp.lt.s32.totalorder %s10, 1
          %s143 = scalar_select %p142, %s10, 1
          %s144 = smul.addr %s143, 8
          %s145 = scalar_lea.vmem %s0, %s144
        $region28: #{_cifar_embed_apply.1} parent=23 // pred_fallthru
          _
      $region24: #{_cifar_embed_apply.1} parent=5 // pred_fallthru
        _
      %p146 = scmp.le.s32.totalorder 1, %s10
      %p147 = scmp.lt.s32.totalorder %s10, 3
      %p148 = pnand %p146, %p147
      %p149 = pneg %p148
      // Predicated region
      $region29: #{_cifar_embed_apply.1} parent=5 // pred_check
        _
      $region30: #{_cifar_embed_apply.1} parent=5 // pred_check_branch
        %151 = sbr.rel (%p148) target = $region32
      $region31: #{_cifar_embed_apply.1} parent=5 // pred_region
        %s152 = ssub.s32 %s10, 1
        // Predicated region
        $region33: #{_cifar_embed_apply.1} parent=31 // pred_check
          %p153 = pneg %p57
        $region34: #{_cifar_embed_apply.1} parent=31 // pred_check_branch
          %155 = sbr.rel (%p153) target = $region36
        $region35: #{_cifar_embed_apply.1} parent=31 // pred_region
          %156 = dma.done [#allocation3], 12288
        $region36: #{_cifar_embed_apply.1} parent=31 // pred_fallthru
          _
        %p157 = scmp.lt.s32.totalorder %s15, 1
        %s158 = scalar_select %p157, %s15, 1
        %s159 = smul.addr %s158, 8
        %s160 = scalar_lea.vmem %s0, %s159
        %p161 = pneg %p36
        %p162 = pneg %p33
        %p163 = pneg %p57
        %p164 = pneg %p54
        %p165 = pneg %p78
        %p166 = pneg %p75
        %p167 = pneg %p104
        %p168 = pneg %p101
        %p169 = scmp.lt.s32.totalorder %s15, 1
        %s170 = scalar_select %p169, %s15, 1
        %s171 = smul.addr %s170, 8
        %s172 = smul.addr %s171, 8
        %s173 = scalar_lea.vmem %s3, %s172
        %p174 = scmp.lt.s32.totalorder %s15, 1
        %s175 = scalar_select %p174, %s15, 1
        %s176 = smul.addr %s175, 8
        %s177 = scalar_lea.vmem %s0, %s176
        %p178 = scmp.lt.s32.totalorder %s15, 1
        %s179 = scalar_select %p178, %s15, 1
        %s180 = smul.addr %s179, 8
        %s181 = smul.addr %s180, 8
        %s182 = scalar_lea.vmem %s3, %s181
        %v183 = vld [vmem:[%s177] sm:$0xff]
        %v184 = vld [vmem:[#allocation2] sm:$0xff]
        %v185 = vld [vmem:[#allocation2 + $0x8] sm:$0xff]
        %v186 = vld [vmem:[#allocation2 + $0x10] sm:$0xff]
        %v187 = vld [vmem:[#allocation2 + $0x18] sm:$0xff]
        %v188 = vld [vmem:[#allocation2 + $0x20] sm:$0xff]
        %v189 = vld [vmem:[#allocation2 + $0x28] sm:$0xff]
        %v190 = vld [vmem:[#allocation2 + $0x30] sm:$0xff]
        %v191 = vld [vmem:[#allocation2 + $0x38] sm:$0xff]
        %v192 = vld [vmem:[#allocation2 + $0x40] sm:$0xff]
        %v193 = vld [vmem:[#allocation2 + $0x48] sm:$0xff]
        %v194 = vld [vmem:[#allocation2 + $0x50] sm:$0xff]
        %v195 = vld [vmem:[#allocation2 + $0x58] sm:$0xff]
        %v196 = vld [vmem:[#allocation2 + $0x60] sm:$0xff]
        %v197 = vld [vmem:[#allocation2 + $0x68] sm:$0xff]
        %v198 = vld [vmem:[#allocation2 + $0x70] sm:$0xff]
        %v199 = vld [vmem:[#allocation2 + $0x78] sm:$0xff]
        %v200 = vld [vmem:[#allocation2 + $0x80] sm:$0xff]
        %v201 = vld [vmem:[#allocation2 + $0x88] sm:$0xff]
        %v202 = vld [vmem:[#allocation2 + $0x90] sm:$0xff]
        %v203 = vld [vmem:[#allocation2 + $0x98] sm:$0xff]
        %v204 = vld [vmem:[#allocation2 + $0xa0] sm:$0xff]
        %v205 = vld [vmem:[#allocation2 + $0xa8] sm:$0xff]
        %v206 = vld [vmem:[#allocation2 + $0xb0] sm:$0xff]
        %v207 = vld [vmem:[#allocation2 + $0xb8] sm:$0xff]
        %v208 = vld [vmem:[#allocation2 + $0xc0] sm:$0xff]
        %v209 = vld [vmem:[#allocation2 + $0xc8] sm:$0xff]
        %v210 = vld [vmem:[#allocation2 + $0xd0] sm:$0xff]
        %v211 = vld [vmem:[#allocation2 + $0xd8] sm:$0xff]
        %v212 = vld [vmem:[#allocation2 + $0xe0] sm:$0xff]
        %v213 = vld [vmem:[#allocation2 + $0xe8] sm:$0xff]
        %v214 = vld [vmem:[#allocation2 + $0xf0] sm:$0xff]
        %v215 = vld [vmem:[#allocation2 + $0xf8] sm:$0xff]
        %v216 = vld [vmem:[#allocation2 + $0x100] sm:$0xff]
        %v217 = vld [vmem:[#allocation2 + $0x108] sm:$0xff]
        %v218 = vld [vmem:[#allocation2 + $0x110] sm:$0xff]
        %v219 = vld [vmem:[#allocation2 + $0x118] sm:$0xff]
        %v220 = vld [vmem:[#allocation2 + $0x120] sm:$0xff]
        %v221 = vld [vmem:[#allocation2 + $0x128] sm:$0xff]
        %v222 = vld [vmem:[#allocation2 + $0x130] sm:$0xff]
        %v223 = vld [vmem:[#allocation2 + $0x138] sm:$0xff]
        %v224 = vld [vmem:[#allocation2 + $0x140] sm:$0xff]
        %v225 = vld [vmem:[#allocation2 + $0x148] sm:$0xff]
        %v226 = vld [vmem:[#allocation2 + $0x150] sm:$0xff]
        %v227 = vld [vmem:[#allocation2 + $0x158] sm:$0xff]
        %v228 = vld [vmem:[#allocation2 + $0x160] sm:$0xff]
        %v229 = vld [vmem:[#allocation2 + $0x168] sm:$0xff]
        %v230 = vld [vmem:[#allocation2 + $0x170] sm:$0xff]
        %v231 = vld [vmem:[#allocation2 + $0x178] sm:$0xff]
        %v232 = vld [vmem:[#allocation2 + $0x180] sm:$0xff]
        %v233 = vld [vmem:[#allocation2 + $0x188] sm:$0xff]
        %v234 = vld [vmem:[#allocation2 + $0x190] sm:$0xff]
        %v235 = vld [vmem:[#allocation2 + $0x198] sm:$0xff]
        %v236 = vld [vmem:[#allocation2 + $0x1a0] sm:$0xff]
        %v237 = vld [vmem:[#allocation2 + $0x1a8] sm:$0xff]
        %v238 = vld [vmem:[#allocation2 + $0x1b0] sm:$0xff]
        %v239 = vld [vmem:[#allocation2 + $0x1b8] sm:$0xff]
        %v240 = vld [vmem:[#allocation2 + $0x1c0] sm:$0xff]
        %v241 = vld [vmem:[#allocation2 + $0x1c8] sm:$0xff]
        %v242 = vld [vmem:[#allocation2 + $0x1d0] sm:$0xff]
        %v243 = vld [vmem:[#allocation2 + $0x1d8] sm:$0xff]
        %v244 = vld [vmem:[#allocation2 + $0x1e0] sm:$0xff]
        %v245 = vld [vmem:[#allocation2 + $0x1e8] sm:$0xff]
        %v246 = vld [vmem:[#allocation2 + $0x1f0] sm:$0xff]
        %v247 = vld [vmem:[#allocation2 + $0x1f8] sm:$0xff]
        %v248 = vld [vmem:[#allocation2 + $0x200] sm:$0xff]
        %v249 = vld [vmem:[#allocation2 + $0x208] sm:$0xff]
        %v250 = vld [vmem:[#allocation2 + $0x210] sm:$0xff]
        %v251 = vld [vmem:[#allocation2 + $0x218] sm:$0xff]
        %v252 = vld [vmem:[#allocation2 + $0x220] sm:$0xff]
        %v253 = vld [vmem:[#allocation2 + $0x228] sm:$0xff]
        %v254 = vld [vmem:[#allocation2 + $0x230] sm:$0xff]
        %v255 = vld [vmem:[#allocation2 + $0x238] sm:$0xff]
        %v256 = vld [vmem:[#allocation2 + $0x240] sm:$0xff]
        %v257 = vld [vmem:[#allocation2 + $0x248] sm:$0xff]
        %v258 = vld [vmem:[#allocation2 + $0x250] sm:$0xff]
        %v259 = vld [vmem:[#allocation2 + $0x258] sm:$0xff]
        %v260 = vld [vmem:[#allocation2 + $0x260] sm:$0xff]
        %v261 = vld [vmem:[#allocation2 + $0x268] sm:$0xff]
        %v262 = vld [vmem:[#allocation2 + $0x270] sm:$0xff]
        %v263 = vld [vmem:[#allocation2 + $0x278] sm:$0xff]
        %v264 = vld [vmem:[#allocation2 + $0x280] sm:$0xff]
        %v265 = vld [vmem:[#allocation2 + $0x288] sm:$0xff]
        %v266 = vld [vmem:[#allocation2 + $0x290] sm:$0xff]
        %v267 = vld [vmem:[#allocation2 + $0x298] sm:$0xff]
        %v268 = vld [vmem:[#allocation2 + $0x2a0] sm:$0xff]
        %v269 = vld [vmem:[#allocation2 + $0x2a8] sm:$0xff]
        %v270 = vld [vmem:[#allocation2 + $0x2b0] sm:$0xff]
        %v271 = vld [vmem:[#allocation2 + $0x2b8] sm:$0xff]
        %v272 = vld [vmem:[#allocation2 + $0x2c0] sm:$0xff]
        %v273 = vld [vmem:[#allocation2 + $0x2c8] sm:$0xff]
        %v274 = vld [vmem:[#allocation2 + $0x2d0] sm:$0xff]
        %v275 = vld [vmem:[#allocation2 + $0x2d8] sm:$0xff]
        %v276 = vld [vmem:[#allocation2 + $0x2e0] sm:$0xff]
        %v277 = vld [vmem:[#allocation2 + $0x2e8] sm:$0xff]
        %v278 = vld [vmem:[#allocation2 + $0x2f0] sm:$0xff]
        %v279 = vld [vmem:[#allocation2 + $0x2f8] sm:$0xff]
        %v280 = vld [vmem:[%s2] sm:$0xff]
        %v282 = vlaneseq
        %v283 = vshrl.u32 %v282, 7
        %v284 = vsub.s32 0, %v283
        %v285 = vrot.slane %v280, %v284
        %v286 = vlaneseq
        %v287 = vshrl.u32 %v286, 7
        %v288 = vsub.s32 1, %v287
        %v289 = vrot.slane %v280, %v288
        %v290 = vlaneseq
        %v291 = vshrl.u32 %v290, 7
        %v292 = vsub.s32 2, %v291
        %v293 = vrot.slane %v280, %v292
        %v294 = vlaneseq
        %v295 = vshrl.u32 %v294, 7
        %v296 = vsub.s32 3, %v295
        %v297 = vrot.slane %v280, %v296
        %v298 = vlaneseq
        %v299 = vshrl.u32 %v298, 7
        %v300 = vsub.s32 4, %v299
        %v301 = vrot.slane %v280, %v300
        %v302 = vlaneseq
        %v303 = vshrl.u32 %v302, 7
        %v304 = vsub.s32 5, %v303
        %v305 = vrot.slane %v280, %v304
        %v306 = vlaneseq
        %v307 = vshrl.u32 %v306, 7
        %v308 = vsub.s32 6, %v307
        %v309 = vrot.slane %v280, %v308
        %v310 = vlaneseq
        %v311 = vshrl.u32 %v310, 7
        %v312 = vsub.s32 7, %v311
        %v313 = vrot.slane %v280, %v312
        %vm322 = vcmask 785408
        %v324 = vsel %vm322, %v183, 0
        %326 = vmatprep.subr.mxu0 %v185
        %327 = vmatpush1.msra.mxu0 %v184
        %328 = vmatprep.subr.mxu0 %v193
        %329 = vmatpush1.msra.mxu0 %v192
        %330 = vmatprep.subr.mxu0 %v201
        %331 = vmatpush1.msra.mxu0 %v200
        %332 = vmatprep.subr.mxu0 %v209
        %333 = vmatpush1.msra.mxu0 %v208
        %334 = vmatprep.subr.mxu0 %v217
        %335 = vmatpush1.msra.mxu0 %v216
        %336 = vmatprep.subr.mxu0 %v225
        %337 = vmatpush1.msra.mxu0 %v224
        %338 = vmatprep.subr.mxu0 %v233
        %339 = vmatpush1.msra.mxu0 %v232
        %340 = vmatprep.subr.mxu0 %v241
        %341 = vmatpush1.msra.mxu0 %v240
        %342 = vmatprep.subr.mxu0 %v249
        %343 = vmatpush1.msra.mxu0 %v248
        %344 = vmatprep.subr.mxu0 %v257
        %345 = vmatpush1.msra.mxu0 %v256
        %346 = vmatprep.subr.mxu0 %v265
        %347 = vmatpush1.msra.mxu0 %v264
        %348 = vmatprep.subr.mxu0 %v273
        %349 = vmatpush1.msra.mxu0 %v272
        %350 = vmatprep.subr.mxu0 0.0
        %351 = vmatpush1.msra.mxu0 0.0
        %352 = vmatprep.subr.mxu0 0.0
        %353 = vmatpush1.msra.mxu0 0.0
        %354 = vmatprep.subr.mxu0 0.0
        %355 = vmatpush1.msra.mxu0 0.0
        %356 = vmatprep.subr.mxu0 0.0
        %357 = vmatpush1.msra.mxu0 0.0
        %358 = vmatprep.subr.mxu0 0.0
        %359 = vmatpush1.msra.mxu0 0.0
        %360 = vmatprep.subr.mxu0 0.0
        %361 = vmatpush1.msra.mxu0 0.0
        %362 = vmatprep.subr.mxu0 0.0
        %363 = vmatpush1.msra.mxu0 0.0
        %364 = vmatprep.subr.mxu0 0.0
        %365 = vmatpush1.msra.mxu0 0.0
        %366 = vmatprep.subr.mxu0 0.0
        %367 = vmatpush1.msra.mxu0 0.0
        %368 = vmatprep.subr.mxu0 0.0
        %369 = vmatpush1.msra.mxu0 0.0
        %370 = vmatprep.subr.mxu0 0.0
        %371 = vmatpush1.msra.mxu0 0.0
        %372 = vmatprep.subr.mxu0 0.0
        %373 = vmatpush1.msra.mxu0 0.0
        %374 = vmatprep.subr.mxu0 0.0
        %375 = vmatpush1.msra.mxu0 0.0
        %376 = vmatprep.subr.mxu0 0.0
        %377 = vmatpush1.msra.mxu0 0.0
        %378 = vmatprep.subr.mxu0 0.0
        %379 = vmatpush1.msra.mxu0 0.0
        %380 = vmatprep.subr.mxu0 0.0
        %381 = vmatpush1.msra.mxu0 0.0
        %382 = vmatprep.subr.mxu0 0.0
        %383 = vmatpush1.msra.mxu0 0.0
        %384 = vmatprep.subr.mxu0 0.0
        %385 = vmatpush1.msra.mxu0 0.0
        %386 = vmatprep.subr.mxu0 0.0
        %387 = vmatpush1.msra.mxu0 0.0
        %388 = vmatprep.subr.mxu0 0.0
        %389 = vmatpush1.msra.mxu0 0.0
        %390 = vmatprep.mubr.f32.mxu0 0.0
        %391 = vmatmul.mubr.f32.gmra.mrb[0].mxu0 %v324
        %v392 = vpop.f32.mrb[0].mxu0
        %v393 = vadd.f32 %v285, %v392
        %v394 = vpop.f32.mrb[0].mxu0
        %v395 = vadd.f32 %v289, %v394
        %396 = vdwg.mxu0
        %397 = vmatprep.subr.mxu0 %v187
        %398 = vmatpush1.msra.mxu0 %v186
        %399 = vmatprep.subr.mxu0 %v195
        %400 = vmatpush1.msra.mxu0 %v194
        %401 = vmatprep.subr.mxu0 %v203
        %402 = vmatpush1.msra.mxu0 %v202
        %403 = vmatprep.subr.mxu0 %v211
        %404 = vmatpush1.msra.mxu0 %v210
        %405 = vmatprep.subr.mxu0 %v219
        %406 = vmatpush1.msra.mxu0 %v218
        %407 = vmatprep.subr.mxu0 %v227
        %408 = vmatpush1.msra.mxu0 %v226
        %409 = vmatprep.subr.mxu0 %v235
        %410 = vmatpush1.msra.mxu0 %v234
        %411 = vmatprep.subr.mxu0 %v243
        %412 = vmatpush1.msra.mxu0 %v242
        %413 = vmatprep.subr.mxu0 %v251
        %414 = vmatpush1.msra.mxu0 %v250
        %415 = vmatprep.subr.mxu0 %v259
        %416 = vmatpush1.msra.mxu0 %v258
        %417 = vmatprep.subr.mxu0 %v267
        %418 = vmatpush1.msra.mxu0 %v266
        %419 = vmatprep.subr.mxu0 %v275
        %420 = vmatpush1.msra.mxu0 %v274
        %421 = vmatprep.subr.mxu0 0.0
        %422 = vmatpush1.msra.mxu0 0.0
        %423 = vmatprep.subr.mxu0 0.0
        %424 = vmatpush1.msra.mxu0 0.0
        %425 = vmatprep.subr.mxu0 0.0
        %426 = vmatpush1.msra.mxu0 0.0
        %427 = vmatprep.subr.mxu0 0.0
        %428 = vmatpush1.msra.mxu0 0.0
        %429 = vmatprep.subr.mxu0 0.0
        %430 = vmatpush1.msra.mxu0 0.0
        %431 = vmatprep.subr.mxu0 0.0
        %432 = vmatpush1.msra.mxu0 0.0
        %433 = vmatprep.subr.mxu0 0.0
        %434 = vmatpush1.msra.mxu0 0.0
        %435 = vmatprep.subr.mxu0 0.0
        %436 = vmatpush1.msra.mxu0 0.0
        %437 = vmatprep.subr.mxu0 0.0
        %438 = vmatpush1.msra.mxu0 0.0
        %439 = vmatprep.subr.mxu0 0.0
        %440 = vmatpush1.msra.mxu0 0.0
        %441 = vmatprep.subr.mxu0 0.0
        %442 = vmatpush1.msra.mxu0 0.0
        %443 = vmatprep.subr.mxu0 0.0
        %444 = vmatpush1.msra.mxu0 0.0
        %445 = vmatprep.subr.mxu0 0.0
        %446 = vmatpush1.msra.mxu0 0.0
        %447 = vmatprep.subr.mxu0 0.0
        %448 = vmatpush1.msra.mxu0 0.0
        %449 = vmatprep.subr.mxu0 0.0
        %450 = vmatpush1.msra.mxu0 0.0
        %451 = vmatprep.subr.mxu0 0.0
        %452 = vmatpush1.msra.mxu0 0.0
        %453 = vmatprep.subr.mxu0 0.0
        %454 = vmatpush1.msra.mxu0 0.0
        %455 = vmatprep.subr.mxu0 0.0
        %456 = vmatpush1.msra.mxu0 0.0
        %457 = vmatprep.subr.mxu0 0.0
        %458 = vmatpush1.msra.mxu0 0.0
        %459 = vmatprep.subr.mxu0 0.0
        %460 = vmatpush1.msra.mxu0 0.0
        %461 = vmatprep.mubr.f32.mxu0 0.0
        %462 = vmatmul.mubr.f32.gmra.mrb[0].mxu0 %v324
        %v463 = vpop.f32.mrb[0].mxu0
        %v464 = vadd.f32 %v293, %v463
        %v465 = vpop.f32.mrb[0].mxu0
        %v466 = vadd.f32 %v297, %v465
        %467 = vdwg.mxu0
        %468 = vmatprep.subr.mxu0 %v189
        %469 = vmatpush1.msra.mxu0 %v188
        %470 = vmatprep.subr.mxu0 %v197
        %471 = vmatpush1.msra.mxu0 %v196
        %472 = vmatprep.subr.mxu0 %v205
        %473 = vmatpush1.msra.mxu0 %v204
        %474 = vmatprep.subr.mxu0 %v213
        %475 = vmatpush1.msra.mxu0 %v212
        %476 = vmatprep.subr.mxu0 %v221
        %477 = vmatpush1.msra.mxu0 %v220
        %478 = vmatprep.subr.mxu0 %v229
        %479 = vmatpush1.msra.mxu0 %v228
        %480 = vmatprep.subr.mxu0 %v237
        %481 = vmatpush1.msra.mxu0 %v236
        %482 = vmatprep.subr.mxu0 %v245
        %483 = vmatpush1.msra.mxu0 %v244
        %484 = vmatprep.subr.mxu0 %v253
        %485 = vmatpush1.msra.mxu0 %v252
        %486 = vmatprep.subr.mxu0 %v261
        %487 = vmatpush1.msra.mxu0 %v260
        %488 = vmatprep.subr.mxu0 %v269
        %489 = vmatpush1.msra.mxu0 %v268
        %490 = vmatprep.subr.mxu0 %v277
        %491 = vmatpush1.msra.mxu0 %v276
        %492 = vmatprep.subr.mxu0 0.0
        %493 = vmatpush1.msra.mxu0 0.0
        %494 = vmatprep.subr.mxu0 0.0
        %495 = vmatpush1.msra.mxu0 0.0
        %496 = vmatprep.subr.mxu0 0.0
        %497 = vmatpush1.msra.mxu0 0.0
        %498 = vmatprep.subr.mxu0 0.0
        %499 = vmatpush1.msra.mxu0 0.0
        %500 = vmatprep.subr.mxu0 0.0
        %501 = vmatpush1.msra.mxu0 0.0
        %502 = vmatprep.subr.mxu0 0.0
        %503 = vmatpush1.msra.mxu0 0.0
        %504 = vmatprep.subr.mxu0 0.0
        %505 = vmatpush1.msra.mxu0 0.0
        %506 = vmatprep.subr.mxu0 0.0
        %507 = vmatpush1.msra.mxu0 0.0
        %508 = vmatprep.subr.mxu0 0.0
        %509 = vmatpush1.msra.mxu0 0.0
        %510 = vmatprep.subr.mxu0 0.0
        %511 = vmatpush1.msra.mxu0 0.0
        %512 = vmatprep.subr.mxu0 0.0
        %513 = vmatpush1.msra.mxu0 0.0
        %514 = vmatprep.subr.mxu0 0.0
        %515 = vmatpush1.msra.mxu0 0.0
        %516 = vmatprep.subr.mxu0 0.0
        %517 = vmatpush1.msra.mxu0 0.0
        %518 = vmatprep.subr.mxu0 0.0
        %519 = vmatpush1.msra.mxu0 0.0
        %520 = vmatprep.subr.mxu0 0.0
        %521 = vmatpush1.msra.mxu0 0.0
        %522 = vmatprep.subr.mxu0 0.0
        %523 = vmatpush1.msra.mxu0 0.0
        %524 = vmatprep.subr.mxu0 0.0
        %525 = vmatpush1.msra.mxu0 0.0
        %526 = vmatprep.subr.mxu0 0.0
        %527 = vmatpush1.msra.mxu0 0.0
        %528 = vmatprep.subr.mxu0 0.0
        %529 = vmatpush1.msra.mxu0 0.0
        %530 = vmatprep.subr.mxu0 0.0
        %531 = vmatpush1.msra.mxu0 0.0
        %532 = vmatprep.mubr.f32.mxu0 0.0
        %533 = vmatmul.mubr.f32.gmra.mrb[0].mxu0 %v324
        %v534 = vpop.f32.mrb[0].mxu0
        %v535 = vadd.f32 %v301, %v534
        %v536 = vpop.f32.mrb[0].mxu0
        %v537 = vadd.f32 %v305, %v536
        %538 = vdwg.mxu0
        %539 = vmatprep.subr.mxu0 %v191
        %540 = vmatpush1.msra.mxu0 %v190
        %541 = vmatprep.subr.mxu0 %v199
        %542 = vmatpush1.msra.mxu0 %v198
        %543 = vmatprep.subr.mxu0 %v207
        %544 = vmatpush1.msra.mxu0 %v206
        %545 = vmatprep.subr.mxu0 %v215
        %546 = vmatpush1.msra.mxu0 %v214
        %547 = vmatprep.subr.mxu0 %v223
        %548 = vmatpush1.msra.mxu0 %v222
        %549 = vmatprep.subr.mxu0 %v231
        %550 = vmatpush1.msra.mxu0 %v230
        %551 = vmatprep.subr.mxu0 %v239
        %552 = vmatpush1.msra.mxu0 %v238
        %553 = vmatprep.subr.mxu0 %v247
        %554 = vmatpush1.msra.mxu0 %v246
        %555 = vmatprep.subr.mxu0 %v255
        %556 = vmatpush1.msra.mxu0 %v254
        %557 = vmatprep.subr.mxu0 %v263
        %558 = vmatpush1.msra.mxu0 %v262
        %559 = vmatprep.subr.mxu0 %v271
        %560 = vmatpush1.msra.mxu0 %v270
        %561 = vmatprep.subr.mxu0 %v279
        %562 = vmatpush1.msra.mxu0 %v278
        %563 = vmatprep.subr.mxu0 0.0
        %564 = vmatpush1.msra.mxu0 0.0
        %565 = vmatprep.subr.mxu0 0.0
        %566 = vmatpush1.msra.mxu0 0.0
        %567 = vmatprep.subr.mxu0 0.0
        %568 = vmatpush1.msra.mxu0 0.0
        %569 = vmatprep.subr.mxu0 0.0
        %570 = vmatpush1.msra.mxu0 0.0
        %571 = vmatprep.subr.mxu0 0.0
        %572 = vmatpush1.msra.mxu0 0.0
        %573 = vmatprep.subr.mxu0 0.0
        %574 = vmatpush1.msra.mxu0 0.0
        %575 = vmatprep.subr.mxu0 0.0
        %576 = vmatpush1.msra.mxu0 0.0
        %577 = vmatprep.subr.mxu0 0.0
        %578 = vmatpush1.msra.mxu0 0.0
        %579 = vmatprep.subr.mxu0 0.0
        %580 = vmatpush1.msra.mxu0 0.0
        %581 = vmatprep.subr.mxu0 0.0
        %582 = vmatpush1.msra.mxu0 0.0
        %583 = vmatprep.subr.mxu0 0.0
        %584 = vmatpush1.msra.mxu0 0.0
        %585 = vmatprep.subr.mxu0 0.0
        %586 = vmatpush1.msra.mxu0 0.0
        %587 = vmatprep.subr.mxu0 0.0
        %588 = vmatpush1.msra.mxu0 0.0
        %589 = vmatprep.subr.mxu0 0.0
        %590 = vmatpush1.msra.mxu0 0.0
        %591 = vmatprep.subr.mxu0 0.0
        %592 = vmatpush1.msra.mxu0 0.0
        %593 = vmatprep.subr.mxu0 0.0
        %594 = vmatpush1.msra.mxu0 0.0
        %595 = vmatprep.subr.mxu0 0.0
        %596 = vmatpush1.msra.mxu0 0.0
        %597 = vmatprep.subr.mxu0 0.0
        %598 = vmatpush1.msra.mxu0 0.0
        %599 = vmatprep.subr.mxu0 0.0
        %600 = vmatpush1.msra.mxu0 0.0
        %601 = vmatprep.subr.mxu0 0.0
        %602 = vmatpush1.msra.mxu0 0.0
        %603 = vmatprep.mubr.f32.mxu0 0.0
        %604 = vmatmul.mubr.f32.gmra.mrb[0].mxu0 %v324
        %v605 = vpop.f32.mrb[0].mxu0
        %v606 = vadd.f32 %v309, %v605
        %v607 = vpop.f32.mrb[0].mxu0
        %v608 = vadd.f32 %v313, %v607
        %609 = vdwg.mxu0
        %610 = vst [vmem:[%s182] sm:$0xff] %v393
        %611 = vst [vmem:[%s182 + $0x8] sm:$0xff] %v395
        %612 = vst [vmem:[%s182 + $0x10] sm:$0xff] %v464
        %613 = vst [vmem:[%s182 + $0x18] sm:$0xff] %v466
        %614 = vst [vmem:[%s182 + $0x20] sm:$0xff] %v535
        %615 = vst [vmem:[%s182 + $0x28] sm:$0xff] %v537
        %616 = vst [vmem:[%s182 + $0x30] sm:$0xff] %v606
        %617 = vst [vmem:[%s182 + $0x38] sm:$0xff] %v608
        %p618 = scmp.lt.s32.totalorder %s15, 1
        %s619 = scalar_select %p618, %s15, 1
        %s620 = smul.addr %s619, 8
        %s621 = smul.addr %s620, 8
        %s622 = scalar_lea.vmem %s3, %s621
        // Predicated region
        $region37: #{_cifar_embed_apply.1} parent=31 // pred_check
          %p623 = pneg %p101
        $region38: #{_cifar_embed_apply.1} parent=31 // pred_check_branch
          %625 = sbr.rel (%p623) target = $region40
        $region39: #{_cifar_embed_apply.1} parent=31 // pred_region
          _
        $region40: #{_cifar_embed_apply.1} parent=31 // pred_fallthru
          _
      $region32: #{_cifar_embed_apply.1} parent=5 // pred_fallthru
        _
      %p626 = scmp.le.s32.totalorder 2, %s10
      // Predicated region
      $region41: #{_cifar_embed_apply.1} parent=5 // pred_check
        %p627 = pneg %p626
      $region42: #{_cifar_embed_apply.1} parent=5 // pred_check_branch
        %629 = sbr.rel (%p627) target = $region44
      $region43: #{_cifar_embed_apply.1} parent=5 // pred_region
        %s630 = ssub.s32 %s10, 2
        // Predicated region
        $region45: #{_cifar_embed_apply.1} parent=43 // pred_check
          %p631 = pneg %p107
        $region46: #{_cifar_embed_apply.1} parent=43 // pred_check_branch
          %633 = sbr.rel (%p631) target = $region48
        $region47: #{_cifar_embed_apply.1} parent=43 // pred_region
          %p634 = scmp.lt.s32.totalorder %s16, 1
          %s635 = scalar_select %p634, %s16, 1
          %s636 = smul.addr %s635, 8
          %s637 = smul.addr %s636, 8
          %s638 = scalar_lea.vmem %s3, %s637
        $region48: #{_cifar_embed_apply.1} parent=43 // pred_fallthru
          _
      $region44: #{_cifar_embed_apply.1} parent=5 // pred_fallthru
        _
    $region6: #{_cifar_embed_apply.1} parent=1 // loop_footer
      %s14 = sadd.s32 1, %s10
    $region7: #{_cifar_embed_apply.1} parent=1 // loop_footer_branch
      %9 = sbr.rel target = $region3
    $region8: #{_cifar_embed_apply.1} parent=1 // loop_exit
      _
    %639 = vsyncpa [#allocation3], 1
    %s640 = scalar_lea.sflag [#allocation3], 1
    %641 = vsyncpa %s640, 1

// kernel: _cifar_embed_apply.1
$region0: #{_cifar_embed_apply.1}
  #allocation0 [shape = 'u32[]', space=smem, size = 0x4, offset = 0x4, fixed_abs, tag = 'smem constant byte address 0x4 - core index']
  #allocation1 [shape = 'u32[144,128]{1,0:T(1,128)}', space=vmem, size = 0x12000, scoped, tag = 'internal scratch']
  %s0 = inlined_call_operand.vmem [shape: f32[16,96], index: 0, kind: input, shape index: {}]
  %s1 = inlined_call_operand.hbm [shape: f32[96,1024], index: 1, kind: input, shape index: {}]
  %s2 = inlined_call_operand.vmem [shape: f32[1,1024], index: 2, kind: input, shape index: {}]
  %s3 = inlined_call_operand.vmem [shape: f32[16,1024], index: 3, kind: output, shape index: {}]
  %s4 = sld [smem:[#allocation0]]
  $region49: #{_cifar_embed_apply.1} parent=0
    _
  %s6 = ssub.s32 1, %s4
  %s7 = scalar_select 0, %s6, %s4
  $region1: #{_cifar_embed_apply.1} parent=0
    #allocation2 [shape = 'u8[393216]{0}', space=vmem, size = 0x60000, scoped, tag = 'input window, operand 1, single buffered']
    #allocation3 [shape = 's32[2]{0}', space=sflag, size = 0x8, scoped, tag = 'scoped memory for _cifar_embed_apply.1']
    %8 = vsyncpa [#allocation3], 0
    loop: start=0, step=1, limit=4
    $region2: #{_cifar_embed_apply.1} parent=1 // loop_pre_header
      _
    $region3: #{_cifar_embed_apply.1} parent=1 // loop_header
      %s10 = sphi 0, %s14
      %p11 = scmp.ge.s32.totalorder %s10, 4
      %s20 = sphi 0, %s22
      %s23 = sphi 0, %s20
      %s24 = sphi 0, %s23
      %s40 = sphi 0, %s24
      %s44 = sphi 0, %s44
      %s46 = sphi 0, %s44
      %s47 = sphi 0, %s46
      %s61 = sphi 0, %s47
      %s65 = sphi 0, %s65
      %s67 = sphi 0, %s65
      %s68 = sphi 0, %s67
      %s82 = sphi 0, %s68
      %s88 = sphi 0, %s90
      %s91 = sphi 0, %s88
      %s92 = sphi 0, %s91
      %s108 = sphi 0, %s92
    $region4: #{_cifar_embed_apply.1} parent=1 // loop_header_branch
      %13 = sbr.rel (%p11) target = $region8
    $region5: #{_cifar_embed_apply.1} parent=1 // loop_body
      %s15 = ssub.s32 %s10, 1
      %s16 = ssub.s32 %s10, 2
      %s17 = sadd.s32 %s10, 1
      %s18 = ssub.s32 %s10, %s17
      %p19 = scmp.eq.s32.totalorder %s18, 0
      %s21 = sadd.s32 %s20, 1
      %s22 = scalar_select %p19, %s20, %s21
      %p25 = pneg %p19
      %p26 = scmp.eq.s32.totalorder %s10, 1
      %p27 = por %p25, %p26
      %p28 = scmp.ne.s32.totalorder %s20, %s23
      %p29 = scmp.eq.s32.totalorder %s10, 0
      %p30 = por %p28, %p29
      %p31 = scmp.ne.s32.totalorder %s20, %s23
      %p32 = scmp.eq.s32.totalorder %s15, 1
      %p33 = por %p31, %p32
      %p34 = scmp.ne.s32.totalorder %s23, %s24
      %p35 = scmp.eq.s32.totalorder %s15, 0
      %p36 = por %p34, %p35
      %p37 = scmp.ne.s32.totalorder %s23, %s24
      %p38 = scmp.eq.s32.totalorder %s16, 1
      %p39 = por %p37, %p38
      %p41 = scmp.ne.s32.totalorder %s24, %s40
      %p42 = scmp.eq.s32.totalorder %s16, 0
      %p43 = por %p41, %p42
      %s45 = sadd.s32 %s44, 1
      %p48 = scmp.eq.s32.totalorder %s10, 1
      %p49 = scmp.ne.s32.totalorder %s44, %s46
      %p50 = scmp.eq.s32.totalorder %s10, 0
      %p51 = por %p49, %p50
      %p52 = scmp.ne.s32.totalorder %s44, %s46
      %p53 = scmp.eq.s32.totalorder %s15, 1
      %p54 = por %p52, %p53
      %p55 = scmp.ne.s32.totalorder %s46, %s47
      %p56 = scmp.eq.s32.totalorder %s15, 0
      %p57 = por %p55, %p56
      %p58 = scmp.ne.s32.totalorder %s46, %s47
      %p59 = scmp.eq.s32.totalorder %s16, 1
      %p60 = por %p58, %p59
      %p62 = scmp.ne.s32.totalorder %s47, %s61
      %p63 = scmp.eq.s32.totalorder %s16, 0
      %p64 = por %p62, %p63
      %s66 = sadd.s32 %s65, 1
      %p69 = scmp.eq.s32.totalorder %s10, 1
      %p70 = scmp.ne.s32.totalorder %s65, %s67
      %p71 = scmp.eq.s32.totalorder %s10, 0
      %p72 = por %p70, %p71
      %p73 = scmp.ne.s32.totalorder %s65, %s67
      %p74 = scmp.eq.s32.totalorder %s15, 1
      %p75 = por %p73, %p74
      %p76 = scmp.ne.s32.totalorder %s67, %s68
      %p77 = scmp.eq.s32.totalorder %s15, 0
      %p78 = por %p76, %p77
      %p79 = scmp.ne.s32.totalorder %s67, %s68
      %p80 = scmp.eq.s32.totalorder %s16, 1
      %p81 = por %p79, %p80
      %p83 = scmp.ne.s32.totalorder %s68, %s82
      %p84 = scmp.eq.s32.totalorder %s16, 0
      %p85 = por %p83, %p84
      %s86 = ssub.s32 %s10, %s17
      %p87 = scmp.eq.s32.totalorder %s86, 0
      %s89 = sadd.s32 %s88, 1
      %s90 = scalar_select %p87, %s88, %s89
      %p93 = pneg %p87
      %p94 = scmp.eq.s32.totalorder %s10, 1
      %p95 = por %p93, %p94
      %p96 = scmp.ne.s32.totalorder %s88, %s91
      %p97 = scmp.eq.s32.totalorder %s10, 0
      %p98 = por %p96, %p97
      %p99 = scmp.ne.s32.totalorder %s88, %s91
      %p100 = scmp.eq.s32.totalorder %s15, 1
      %p101 = por %p99, %p100
      %p102 = scmp.ne.s32.totalorder %s91, %s92
      %p103 = scmp.eq.s32.totalorder %s15, 0
      %p104 = por %p102, %p103
      %p105 = scmp.ne.s32.totalorder %s91, %s92
      %p106 = scmp.eq.s32.totalorder %s16, 1
      %p107 = por %p105, %p106
      %p109 = scmp.ne.s32.totalorder %s92, %s108
      %p110 = scmp.eq.s32.totalorder %s16, 0
      %p111 = por %p109, %p110
      %p112 = scmp.le.s32.totalorder 1, %s10
      %p113 = scmp.lt.s32.totalorder %s10, 3
      %p114 = pnand %p112, %p113
      %p115 = pneg %p114
      // Predicated region
      $region9: #{_cifar_embed_apply.1} parent=5 // pred_check
        _
      $region10: #{_cifar_embed_apply.1} parent=5 // pred_check_branch
        %117 = sbr.rel (%p114) target = $region12
      $region11: #{_cifar_embed_apply.1} parent=5 // pred_region
        %s118 = ssub.s32 %s10, 1
        // Predicated region
        $region13: #{_cifar_embed_apply.1} parent=11 // pred_check
          %p119 = pneg %p57
        $region14: #{_cifar_embed_apply.1} parent=11 // pred_check_branch
          %121 = sbr.rel (%p119) target = $region16
        $region15: #{_cifar_embed_apply.1} parent=11 // pred_region
          %s123 = ssub.s32 12288, 12288
          %124 = vsyncadd [#allocation3], %s123
          %s125 = sshll.u32 [#allocation2], 4
          %s126 = int_to_ptr.vmem [resolvable:$true] %s125
          %131 = dma.hbm_to_vmem [thread:$0]  %s1, 12288, %s126, [#allocation3], 1024, 1024, 64
        $region16: #{_cifar_embed_apply.1} parent=11 // pred_fallthru
          _
        // Predicated region
        $region17: #{_cifar_embed_apply.1} parent=11 // pred_check
          %p132 = pneg %p78
        $region18: #{_cifar_embed_apply.1} parent=11 // pred_check_branch
          %134 = sbr.rel (%p132) target = $region20
        $region19: #{_cifar_embed_apply.1} parent=11 // pred_region
          _
        $region20: #{_cifar_embed_apply.1} parent=11 // pred_fallthru
          _
      $region12: #{_cifar_embed_apply.1} parent=5 // pred_fallthru
        _
      %p135 = scmp.lt.s32.totalorder %s10, 2
      // Predicated region
      $region21: #{_cifar_embed_apply.1} parent=5 // pred_check
        %p136 = pneg %p135
      $region22: #{_cifar_embed_apply.1} parent=5 // pred_check_branch
        %138 = sbr.rel (%p136) target = $region24
      $region23: #{_cifar_embed_apply.1} parent=5 // pred_region
        // Predicated region
        $region25: #{_cifar_embed_apply.1} parent=23 // pred_check
          %p139 = pneg %p30
        $region26: #{_cifar_embed_apply.1} parent=23 // pred_check_branch
          %141 = sbr.rel (%p139) target = $region28
        $region27: #{_cifar_embed_apply.1} parent=23 // pred_region
          %p142 = scmp.lt.s32.totalorder %s10, 1
          %s143 = scalar_select %p142, %s10, 1
          %s144 = smul.addr %s143, 8
          %s145 = scalar_lea.vmem %s0, %s144
        $region28: #{_cifar_embed_apply.1} parent=23 // pred_fallthru
          _
      $region24: #{_cifar_embed_apply.1} parent=5 // pred_fallthru
        _
      %p146 = scmp.le.s32.totalorder 1, %s10
      %p147 = scmp.lt.s32.totalorder %s10, 3
      %p148 = pnand %p146, %p147
      %p149 = pneg %p148
      // Predicated region
      $region29: #{_cifar_embed_apply.1} parent=5 // pred_check
        _
      $region30: #{_cifar_embed_apply.1} parent=5 // pred_check_branch
        %151 = sbr.rel (%p148) target = $region32
      $region31: #{_cifar_embed_apply.1} parent=5 // pred_region
        %s152 = ssub.s32 %s10, 1
        // Predicated region
        $region33: #{_cifar_embed_apply.1} parent=31 // pred_check
          %p153 = pneg %p57
        $region34: #{_cifar_embed_apply.1} parent=31 // pred_check_branch
          %155 = sbr.rel (%p153) target = $region36
        $region35: #{_cifar_embed_apply.1} parent=31 // pred_region
          %156 = dma.done [#allocation3], 12288
        $region36: #{_cifar_embed_apply.1} parent=31 // pred_fallthru
          _
        %p157 = scmp.lt.s32.totalorder %s15, 1
        %s158 = scalar_select %p157, %s15, 1
        %s159 = smul.addr %s158, 8
        %s160 = scalar_lea.vmem %s0, %s159
        %p161 = pneg %p36
        %p162 = pneg %p33
        %p163 = pneg %p57
        %p164 = pneg %p54
        %p165 = pneg %p78
        %p166 = pneg %p75
        %p167 = pneg %p104
        %p168 = pneg %p101
        %p169 = scmp.lt.s32.totalorder %s15, 1
        %s170 = scalar_select %p169, %s15, 1
        %s171 = smul.addr %s170, 8
        %s172 = smul.addr %s171, 8
        %s173 = scalar_lea.vmem %s3, %s172
        %p174 = scmp.lt.s32.totalorder %s15, 1
        %s175 = scalar_select %p174, %s15, 1
        %s176 = smul.addr %s175, 8
        %s177 = scalar_lea.vmem %s0, %s176
        %p178 = scmp.lt.s32.totalorder %s15, 1
        %s179 = scalar_select %p178, %s15, 1
        %s180 = smul.addr %s179, 8
        %s181 = smul.addr %s180, 8
        %s182 = scalar_lea.vmem %s3, %s181
        %v183 = vld [vmem:[%s177] sm:$0xff]
        %v184 = vld [vmem:[#allocation2] sm:$0xff]
        %v185 = vld [vmem:[#allocation2 + $0x8] sm:$0xff]
        %v186 = vld [vmem:[#allocation2 + $0x10] sm:$0xff]
        %v187 = vld [vmem:[#allocation2 + $0x18] sm:$0xff]
        %v188 = vld [vmem:[#allocation2 + $0x20] sm:$0xff]
        %v189 = vld [vmem:[#allocation2 + $0x28] sm:$0xff]
        %v190 = vld [vmem:[#allocation2 + $0x30] sm:$0xff]
        %v191 = vld [vmem:[#allocation2 + $0x38] sm:$0xff]
        %v192 = vld [vmem:[#allocation2 + $0x40] sm:$0xff]
        %v193 = vld [vmem:[#allocation2 + $0x48] sm:$0xff]
        %v194 = vld [vmem:[#allocation2 + $0x50] sm:$0xff]
        %v195 = vld [vmem:[#allocation2 + $0x58] sm:$0xff]
        %v196 = vld [vmem:[#allocation2 + $0x60] sm:$0xff]
        %v197 = vld [vmem:[#allocation2 + $0x68] sm:$0xff]
        %v198 = vld [vmem:[#allocation2 + $0x70] sm:$0xff]
        %v199 = vld [vmem:[#allocation2 + $0x78] sm:$0xff]
        %v200 = vld [vmem:[#allocation2 + $0x80] sm:$0xff]
        %v201 = vld [vmem:[#allocation2 + $0x88] sm:$0xff]
        %v202 = vld [vmem:[#allocation2 + $0x90] sm:$0xff]
        %v203 = vld [vmem:[#allocation2 + $0x98] sm:$0xff]
        %v204 = vld [vmem:[#allocation2 + $0xa0] sm:$0xff]
        %v205 = vld [vmem:[#allocation2 + $0xa8] sm:$0xff]
        %v206 = vld [vmem:[#allocation2 + $0xb0] sm:$0xff]
        %v207 = vld [vmem:[#allocation2 + $0xb8] sm:$0xff]
        %v208 = vld [vmem:[#allocation2 + $0xc0] sm:$0xff]
        %v209 = vld [vmem:[#allocation2 + $0xc8] sm:$0xff]
        %v210 = vld [vmem:[#allocation2 + $0xd0] sm:$0xff]
        %v211 = vld [vmem:[#allocation2 + $0xd8] sm:$0xff]
        %v212 = vld [vmem:[#allocation2 + $0xe0] sm:$0xff]
        %v213 = vld [vmem:[#allocation2 + $0xe8] sm:$0xff]
        %v214 = vld [vmem:[#allocation2 + $0xf0] sm:$0xff]
        %v215 = vld [vmem:[#allocation2 + $0xf8] sm:$0xff]
        %v216 = vld [vmem:[#allocation2 + $0x100] sm:$0xff]
        %v217 = vld [vmem:[#allocation2 + $0x108] sm:$0xff]
        %v218 = vld [vmem:[#allocation2 + $0x110] sm:$0xff]
        %v219 = vld [vmem:[#allocation2 + $0x118] sm:$0xff]
        %v220 = vld [vmem:[#allocation2 + $0x120] sm:$0xff]
        %v221 = vld [vmem:[#allocation2 + $0x128] sm:$0xff]
        %v222 = vld [vmem:[#allocation2 + $0x130] sm:$0xff]
        %v223 = vld [vmem:[#allocation2 + $0x138] sm:$0xff]
        %v224 = vld [vmem:[#allocation2 + $0x140] sm:$0xff]
        %v225 = vld [vmem:[#allocation2 + $0x148] sm:$0xff]
        %v226 = vld [vmem:[#allocation2 + $0x150] sm:$0xff]
        %v227 = vld [vmem:[#allocation2 + $0x158] sm:$0xff]
        %v228 = vld [vmem:[#allocation2 + $0x160] sm:$0xff]
        %v229 = vld [vmem:[#allocation2 + $0x168] sm:$0xff]
        %v230 = vld [vmem:[#allocation2 + $0x170] sm:$0xff]
        %v231 = vld [vmem:[#allocation2 + $0x178] sm:$0xff]
        %v232 = vld [vmem:[#allocation2 + $0x180] sm:$0xff]
        %v233 = vld [vmem:[#allocation2 + $0x188] sm:$0xff]
        %v234 = vld [vmem:[#allocation2 + $0x190] sm:$0xff]
        %v235 = vld [vmem:[#allocation2 + $0x198] sm:$0xff]
        %v236 = vld [vmem:[#allocation2 + $0x1a0] sm:$0xff]
        %v237 = vld [vmem:[#allocation2 + $0x1a8] sm:$0xff]
        %v238 = vld [vmem:[#allocation2 + $0x1b0] sm:$0xff]
        %v239 = vld [vmem:[#allocation2 + $0x1b8] sm:$0xff]
        %v240 = vld [vmem:[#allocation2 + $0x1c0] sm:$0xff]
        %v241 = vld [vmem:[#allocation2 + $0x1c8] sm:$0xff]
        %v242 = vld [vmem:[#allocation2 + $0x1d0] sm:$0xff]
        %v243 = vld [vmem:[#allocation2 + $0x1d8] sm:$0xff]
        %v244 = vld [vmem:[#allocation2 + $0x1e0] sm:$0xff]
        %v245 = vld [vmem:[#allocation2 + $0x1e8] sm:$0xff]
        %v246 = vld [vmem:[#allocation2 + $0x1f0] sm:$0xff]
        %v247 = vld [vmem:[#allocation2 + $0x1f8] sm:$0xff]
        %v248 = vld [vmem:[#allocation2 + $0x200] sm:$0xff]
        %v249 = vld [vmem:[#allocation2 + $0x208] sm:$0xff]
        %v250 = vld [vmem:[#allocation2 + $0x210] sm:$0xff]
        %v251 = vld [vmem:[#allocation2 + $0x218] sm:$0xff]
        %v252 = vld [vmem:[#allocation2 + $0x220] sm:$0xff]
        %v253 = vld [vmem:[#allocation2 + $0x228] sm:$0xff]
        %v254 = vld [vmem:[#allocation2 + $0x230] sm:$0xff]
        %v255 = vld [vmem:[#allocation2 + $0x238] sm:$0xff]
        %v256 = vld [vmem:[#allocation2 + $0x240] sm:$0xff]
        %v257 = vld [vmem:[#allocation2 + $0x248] sm:$0xff]
        %v258 = vld [vmem:[#allocation2 + $0x250] sm:$0xff]
        %v259 = vld [vmem:[#allocation2 + $0x258] sm:$0xff]
        %v260 = vld [vmem:[#allocation2 + $0x260] sm:$0xff]
        %v261 = vld [vmem:[#allocation2 + $0x268] sm:$0xff]
        %v262 = vld [vmem:[#allocation2 + $0x270] sm:$0xff]
        %v263 = vld [vmem:[#allocation2 + $0x278] sm:$0xff]
        %v264 = vld [vmem:[#allocation2 + $0x280] sm:$0xff]
        %v265 = vld [vmem:[#allocation2 + $0x288] sm:$0xff]
        %v266 = vld [vmem:[#allocation2 + $0x290] sm:$0xff]
        %v267 = vld [vmem:[#allocation2 + $0x298] sm:$0xff]
        %v268 = vld [vmem:[#allocation2 + $0x2a0] sm:$0xff]
        %v269 = vld [vmem:[#allocation2 + $0x2a8] sm:$0xff]
        %v270 = vld [vmem:[#allocation2 + $0x2b0] sm:$0xff]
        %v271 = vld [vmem:[#allocation2 + $0x2b8] sm:$0xff]
        %v272 = vld [vmem:[#allocation2 + $0x2c0] sm:$0xff]
        %v273 = vld [vmem:[#allocation2 + $0x2c8] sm:$0xff]
        %v274 = vld [vmem:[#allocation2 + $0x2d0] sm:$0xff]
        %v275 = vld [vmem:[#allocation2 + $0x2d8] sm:$0xff]
        %v276 = vld [vmem:[#allocation2 + $0x2e0] sm:$0xff]
        %v277 = vld [vmem:[#allocation2 + $0x2e8] sm:$0xff]
        %v278 = vld [vmem:[#allocation2 + $0x2f0] sm:$0xff]
        %v279 = vld [vmem:[#allocation2 + $0x2f8] sm:$0xff]
        %v280 = vld [vmem:[%s2] sm:$0xff]
        %v282 = vlaneseq
        %v283 = vshrl.u32 %v282, 7
        %v284 = vsub.s32 0, %v283
        %v285 = vrot.slane %v280, %v284
        %v286 = vlaneseq
        %v287 = vshrl.u32 %v286, 7
        %v288 = vsub.s32 1, %v287
        %v289 = vrot.slane %v280, %v288
        %v290 = vlaneseq
        %v291 = vshrl.u32 %v290, 7
        %v292 = vsub.s32 2, %v291
        %v293 = vrot.slane %v280, %v292
        %v294 = vlaneseq
        %v295 = vshrl.u32 %v294, 7
        %v296 = vsub.s32 3, %v295
        %v297 = vrot.slane %v280, %v296
        %v298 = vlaneseq
        %v299 = vshrl.u32 %v298, 7
        %v300 = vsub.s32 4, %v299
        %v301 = vrot.slane %v280, %v300
        %v302 = vlaneseq
        %v303 = vshrl.u32 %v302, 7
        %v304 = vsub.s32 5, %v303
        %v305 = vrot.slane %v280, %v304
        %v306 = vlaneseq
        %v307 = vshrl.u32 %v306, 7
        %v308 = vsub.s32 6, %v307
        %v309 = vrot.slane %v280, %v308
        %v310 = vlaneseq
        %v311 = vshrl.u32 %v310, 7
        %v312 = vsub.s32 7, %v311
        %v313 = vrot.slane %v280, %v312
        %vm322 = vcmask 785408
        %v324 = vsel %vm322, %v183, 0
        %326 = vmatprep.subr.mxu0 %v185
        %327 = vmatpush1.msra.mxu0 %v184
        %328 = vmatprep.subr.mxu0 %v193
        %329 = vmatpush1.msra.mxu0 %v192
        %330 = vmatprep.subr.mxu0 %v201
        %331 = vmatpush1.msra.mxu0 %v200
        %332 = vmatprep.subr.mxu0 %v209
        %333 = vmatpush1.msra.mxu0 %v208
        %334 = vmatprep.subr.mxu0 %v217
        %335 = vmatpush1.msra.mxu0 %v216
        %336 = vmatprep.subr.mxu0 %v225
        %337 = vmatpush1.msra.mxu0 %v224
        %338 = vmatprep.subr.mxu0 %v233
        %339 = vmatpush1.msra.mxu0 %v232
        %340 = vmatprep.subr.mxu0 %v241
        %341 = vmatpush1.msra.mxu0 %v240
        %342 = vmatprep.subr.mxu0 %v249
        %343 = vmatpush1.msra.mxu0 %v248
        %344 = vmatprep.subr.mxu0 %v257
        %345 = vmatpush1.msra.mxu0 %v256
        %346 = vmatprep.subr.mxu0 %v265
        %347 = vmatpush1.msra.mxu0 %v264
        %348 = vmatprep.subr.mxu0 %v273
        %349 = vmatpush1.msra.mxu0 %v272
        %350 = vmatprep.subr.mxu0 0.0
        %351 = vmatpush1.msra.mxu0 0.0
        %352 = vmatprep.subr.mxu0 0.0
        %353 = vmatpush1.msra.mxu0 0.0
        %354 = vmatprep.subr.mxu0 0.0
        %355 = vmatpush1.msra.mxu0 0.0
        %356 = vmatprep.subr.mxu0 0.0
        %357 = vmatpush1.msra.mxu0 0.0
        %358 = vmatprep.subr.mxu0 0.0
        %359 = vmatpush1.msra.mxu0 0.0
        %360 = vmatprep.subr.mxu0 0.0
        %361 = vmatpush1.msra.mxu0 0.0
        %362 = vmatprep.subr.mxu0 0.0
        %363 = vmatpush1.msra.mxu0 0.0
        %364 = vmatprep.subr.mxu0 0.0
        %365 = vmatpush1.msra.mxu0 0.0
        %366 = vmatprep.subr.mxu0 0.0
        %367 = vmatpush1.msra.mxu0 0.0
        %368 = vmatprep.subr.mxu0 0.0
        %369 = vmatpush1.msra.mxu0 0.0
        %370 = vmatprep.subr.mxu0 0.0
        %371 = vmatpush1.msra.mxu0 0.0
        %372 = vmatprep.subr.mxu0 0.0
        %373 = vmatpush1.msra.mxu0 0.0
        %374 = vmatprep.subr.mxu0 0.0
        %375 = vmatpush1.msra.mxu0 0.0
        %376 = vmatprep.subr.mxu0 0.0
        %377 = vmatpush1.msra.mxu0 0.0
        %378 = vmatprep.subr.mxu0 0.0
        %379 = vmatpush1.msra.mxu0 0.0
        %380 = vmatprep.subr.mxu0 0.0
        %381 = vmatpush1.msra.mxu0 0.0
        %382 = vmatprep.subr.mxu0 0.0
        %383 = vmatpush1.msra.mxu0 0.0
        %384 = vmatprep.subr.mxu0 0.0
        %385 = vmatpush1.msra.mxu0 0.0
        %386 = vmatprep.subr.mxu0 0.0
        %387 = vmatpush1.msra.mxu0 0.0
        %388 = vmatprep.subr.mxu0 0.0
        %389 = vmatpush1.msra.mxu0 0.0
        %390 = vmatprep.mubr.f32.mxu0 0.0
        %391 = vmatmul.mubr.f32.gmra.mrb[0].mxu0 %v324
        %v392 = vpop.f32.mrb[0].mxu0
        %v393 = vadd.f32 %v285, %v392
        %v394 = vpop.f32.mrb[0].mxu0
        %v395 = vadd.f32 %v289, %v394
        %396 = vdwg.mxu0
        %397 = vmatprep.subr.mxu0 %v187
        %398 = vmatpush1.msra.mxu0 %v186
        %399 = vmatprep.subr.mxu0 %v195
        %400 = vmatpush1.msra.mxu0 %v194
        %401 = vmatprep.subr.mxu0 %v203
        %402 = vmatpush1.msra.mxu0 %v202
        %403 = vmatprep.subr.mxu0 %v211
        %404 = vmatpush1.msra.mxu0 %v210
        %405 = vmatprep.subr.mxu0 %v219
        %406 = vmatpush1.msra.mxu0 %v218
        %407 = vmatprep.subr.mxu0 %v227
        %408 = vmatpush1.msra.mxu0 %v226
        %409 = vmatprep.subr.mxu0 %v235
        %410 = vmatpush1.msra.mxu0 %v234
        %411 = vmatprep.subr.mxu0 %v243
        %412 = vmatpush1.msra.mxu0 %v242
        %413 = vmatprep.subr.mxu0 %v251
        %414 = vmatpush1.msra.mxu0 %v250
        %415 = vmatprep.subr.mxu0 %v259
        %416 = vmatpush1.msra.mxu0 %v258
        %417 = vmatprep.subr.mxu0 %v267
        %418 = vmatpush1.msra.mxu0 %v266
        %419 = vmatprep.subr.mxu0 %v275
        %420 = vmatpush1.msra.mxu0 %v274
        %421 = vmatprep.subr.mxu0 0.0
        %422 = vmatpush1.msra.mxu0 0.0
        %423 = vmatprep.subr.mxu0 0.0
        %424 = vmatpush1.msra.mxu0 0.0
        %425 = vmatprep.subr.mxu0 0.0
        %426 = vmatpush1.msra.mxu0 0.0
        %427 = vmatprep.subr.mxu0 0.0
        %428 = vmatpush1.msra.mxu0 0.0
        %429 = vmatprep.subr.mxu0 0.0
        %430 = vmatpush1.msra.mxu0 0.0
        %431 = vmatprep.subr.mxu0 0.0
        %432 = vmatpush1.msra.mxu0 0.0
        %433 = vmatprep.subr.mxu0 0.0
        %434 = vmatpush1.msra.mxu0 0.0
        %435 = vmatprep.subr.mxu0 0.0
        %436 = vmatpush1.msra.mxu0 0.0
        %437 = vmatprep.subr.mxu0 0.0
        %438 = vmatpush1.msra.mxu0 0.0
        %439 = vmatprep.subr.mxu0 0.0
        %440 = vmatpush1.msra.mxu0 0.0
        %441 = vmatprep.subr.mxu0 0.0
        %442 = vmatpush1.msra.mxu0 0.0
        %443 = vmatprep.subr.mxu0 0.0
        %444 = vmatpush1.msra.mxu0 0.0
        %445 = vmatprep.subr.mxu0 0.0
        %446 = vmatpush1.msra.mxu0 0.0
        %447 = vmatprep.subr.mxu0 0.0
        %448 = vmatpush1.msra.mxu0 0.0
        %449 = vmatprep.subr.mxu0 0.0
        %450 = vmatpush1.msra.mxu0 0.0
        %451 = vmatprep.subr.mxu0 0.0
        %452 = vmatpush1.msra.mxu0 0.0
        %453 = vmatprep.subr.mxu0 0.0
        %454 = vmatpush1.msra.mxu0 0.0
        %455 = vmatprep.subr.mxu0 0.0
        %456 = vmatpush1.msra.mxu0 0.0
        %457 = vmatprep.subr.mxu0 0.0
        %458 = vmatpush1.msra.mxu0 0.0
        %459 = vmatprep.subr.mxu0 0.0
        %460 = vmatpush1.msra.mxu0 0.0
        %461 = vmatprep.mubr.f32.mxu0 0.0
        %462 = vmatmul.mubr.f32.gmra.mrb[0].mxu0 %v324
        %v463 = vpop.f32.mrb[0].mxu0
        %v464 = vadd.f32 %v293, %v463
        %v465 = vpop.f32.mrb[0].mxu0
        %v466 = vadd.f32 %v297, %v465
        %467 = vdwg.mxu0
        %468 = vmatprep.subr.mxu0 %v189
        %469 = vmatpush1.msra.mxu0 %v188
        %470 = vmatprep.subr.mxu0 %v197
        %471 = vmatpush1.msra.mxu0 %v196
        %472 = vmatprep.subr.mxu0 %v205
        %473 = vmatpush1.msra.mxu0 %v204
        %474 = vmatprep.subr.mxu0 %v213
        %475 = vmatpush1.msra.mxu0 %v212
        %476 = vmatprep.subr.mxu0 %v221
        %477 = vmatpush1.msra.mxu0 %v220
        %478 = vmatprep.subr.mxu0 %v229
        %479 = vmatpush1.msra.mxu0 %v228
        %480 = vmatprep.subr.mxu0 %v237
        %481 = vmatpush1.msra.mxu0 %v236
        %482 = vmatprep.subr.mxu0 %v245
        %483 = vmatpush1.msra.mxu0 %v244
        %484 = vmatprep.subr.mxu0 %v253
        %485 = vmatpush1.msra.mxu0 %v252
        %486 = vmatprep.subr.mxu0 %v261
        %487 = vmatpush1.msra.mxu0 %v260
        %488 = vmatprep.subr.mxu0 %v269
        %489 = vmatpush1.msra.mxu0 %v268
        %490 = vmatprep.subr.mxu0 %v277
        %491 = vmatpush1.msra.mxu0 %v276
        %492 = vmatprep.subr.mxu0 0.0
        %493 = vmatpush1.msra.mxu0 0.0
        %494 = vmatprep.subr.mxu0 0.0
        %495 = vmatpush1.msra.mxu0 0.0
        %496 = vmatprep.subr.mxu0 0.0
        %497 = vmatpush1.msra.mxu0 0.0
        %498 = vmatprep.subr.mxu0 0.0
        %499 = vmatpush1.msra.mxu0 0.0
        %500 = vmatprep.subr.mxu0 0.0
        %501 = vmatpush1.msra.mxu0 0.0
        %502 = vmatprep.subr.mxu0 0.0
        %503 = vmatpush1.msra.mxu0 0.0
        %504 = vmatprep.subr.mxu0 0.0
        %505 = vmatpush1.msra.mxu0 0.0
        %506 = vmatprep.subr.mxu0 0.0
        %507 = vmatpush1.msra.mxu0 0.0
        %508 = vmatprep.subr.mxu0 0.0
        %509 = vmatpush1.msra.mxu0 0.0
        %510 = vmatprep.subr.mxu0 0.0
        %511 = vmatpush1.msra.mxu0 0.0
        %512 = vmatprep.subr.mxu0 0.0
        %513 = vmatpush1.msra.mxu0 0.0
        %514 = vmatprep.subr.mxu0 0.0
        %515 = vmatpush1.msra.mxu0 0.0
        %516 = vmatprep.subr.mxu0 0.0
        %517 = vmatpush1.msra.mxu0 0.0
        %518 = vmatprep.subr.mxu0 0.0
        %519 = vmatpush1.msra.mxu0 0.0
        %520 = vmatprep.subr.mxu0 0.0
        %521 = vmatpush1.msra.mxu0 0.0
        %522 = vmatprep.subr.mxu0 0.0
        %523 = vmatpush1.msra.mxu0 0.0
        %524 = vmatprep.subr.mxu0 0.0
        %525 = vmatpush1.msra.mxu0 0.0
        %526 = vmatprep.subr.mxu0 0.0
        %527 = vmatpush1.msra.mxu0 0.0
        %528 = vmatprep.subr.mxu0 0.0
        %529 = vmatpush1.msra.mxu0 0.0
        %530 = vmatprep.subr.mxu0 0.0
        %531 = vmatpush1.msra.mxu0 0.0
        %532 = vmatprep.mubr.f32.mxu0 0.0
        %533 = vmatmul.mubr.f32.gmra.mrb[0].mxu0 %v324
        %v534 = vpop.f32.mrb[0].mxu0
        %v535 = vadd.f32 %v301, %v534
        %v536 = vpop.f32.mrb[0].mxu0
        %v537 = vadd.f32 %v305, %v536
        %538 = vdwg.mxu0
        %539 = vmatprep.subr.mxu0 %v191
        %540 = vmatpush1.msra.mxu0 %v190
        %541 = vmatprep.subr.mxu0 %v199
        %542 = vmatpush1.msra.mxu0 %v198
        %543 = vmatprep.subr.mxu0 %v207
        %544 = vmatpush1.msra.mxu0 %v206
        %545 = vmatprep.subr.mxu0 %v215
        %546 = vmatpush1.msra.mxu0 %v214
        %547 = vmatprep.subr.mxu0 %v223
        %548 = vmatpush1.msra.mxu0 %v222
        %549 = vmatprep.subr.mxu0 %v231
        %550 = vmatpush1.msra.mxu0 %v230
        %551 = vmatprep.subr.mxu0 %v239
        %552 = vmatpush1.msra.mxu0 %v238
        %553 = vmatprep.subr.mxu0 %v247
        %554 = vmatpush1.msra.mxu0 %v246
        %555 = vmatprep.subr.mxu0 %v255
        %556 = vmatpush1.msra.mxu0 %v254
        %557 = vmatprep.subr.mxu0 %v263
        %558 = vmatpush1.msra.mxu0 %v262
        %559 = vmatprep.subr.mxu0 %v271
        %560 = vmatpush1.msra.mxu0 %v270
        %561 = vmatprep.subr.mxu0 %v279
        %562 = vmatpush1.msra.mxu0 %v278
        %563 = vmatprep.subr.mxu0 0.0
        %564 = vmatpush1.msra.mxu0 0.0
        %565 = vmatprep.subr.mxu0 0.0
        %566 = vmatpush1.msra.mxu0 0.0
        %567 = vmatprep.subr.mxu0 0.0
        %568 = vmatpush1.msra.mxu0 0.0
        %569 = vmatprep.subr.mxu0 0.0
        %570 = vmatpush1.msra.mxu0 0.0
        %571 = vmatprep.subr.mxu0 0.0
        %572 = vmatpush1.msra.mxu0 0.0
        %573 = vmatprep.subr.mxu0 0.0
        %574 = vmatpush1.msra.mxu0 0.0
        %575 = vmatprep.subr.mxu0 0.0
        %576 = vmatpush1.msra.mxu0 0.0
        %577 = vmatprep.subr.mxu0 0.0
        %578 = vmatpush1.msra.mxu0 0.0
        %579 = vmatprep.subr.mxu0 0.0
        %580 = vmatpush1.msra.mxu0 0.0
        %581 = vmatprep.subr.mxu0 0.0
        %582 = vmatpush1.msra.mxu0 0.0
        %583 = vmatprep.subr.mxu0 0.0
        %584 = vmatpush1.msra.mxu0 0.0
        %585 = vmatprep.subr.mxu0 0.0
        %586 = vmatpush1.msra.mxu0 0.0
        %587 = vmatprep.subr.mxu0 0.0
        %588 = vmatpush1.msra.mxu0 0.0
        %589 = vmatprep.subr.mxu0 0.0
        %590 = vmatpush1.msra.mxu0 0.0
        %591 = vmatprep.subr.mxu0 0.0
        %592 = vmatpush1.msra.mxu0 0.0
        %593 = vmatprep.subr.mxu0 0.0
        %594 = vmatpush1.msra.mxu0 0.0
        %595 = vmatprep.subr.mxu0 0.0
        %596 = vmatpush1.msra.mxu0 0.0
        %597 = vmatprep.subr.mxu0 0.0
        %598 = vmatpush1.msra.mxu0 0.0
        %599 = vmatprep.subr.mxu0 0.0
        %600 = vmatpush1.msra.mxu0 0.0
        %601 = vmatprep.subr.mxu0 0.0
        %602 = vmatpush1.msra.mxu0 0.0
        %603 = vmatprep.mubr.f32.mxu0 0.0
        %604 = vmatmul.mubr.f32.gmra.mrb[0].mxu0 %v324
        %v605 = vpop.f32.mrb[0].mxu0
        %v606 = vadd.f32 %v309, %v605
        %v607 = vpop.f32.mrb[0].mxu0
        %v608 = vadd.f32 %v313, %v607
        %609 = vdwg.mxu0
        %610 = vst [vmem:[%s182] sm:$0xff] %v393
        %611 = vst [vmem:[%s182 + $0x8] sm:$0xff] %v395
        %612 = vst [vmem:[%s182 + $0x10] sm:$0xff] %v464
        %613 = vst [vmem:[%s182 + $0x18] sm:$0xff] %v466
        %614 = vst [vmem:[%s182 + $0x20] sm:$0xff] %v535
        %615 = vst [vmem:[%s182 + $0x28] sm:$0xff] %v537
        %616 = vst [vmem:[%s182 + $0x30] sm:$0xff] %v606
        %617 = vst [vmem:[%s182 + $0x38] sm:$0xff] %v608
        %p618 = scmp.lt.s32.totalorder %s15, 1
        %s619 = scalar_select %p618, %s15, 1
        %s620 = smul.addr %s619, 8
        %s621 = smul.addr %s620, 8
        %s622 = scalar_lea.vmem %s3, %s621
        // Predicated region
        $region37: #{_cifar_embed_apply.1} parent=31 // pred_check
          %p623 = pneg %p101
        $region38: #{_cifar_embed_apply.1} parent=31 // pred_check_branch
          %625 = sbr.rel (%p623) target = $region40
        $region39: #{_cifar_embed_apply.1} parent=31 // pred_region
          _
        $region40: #{_cifar_embed_apply.1} parent=31 // pred_fallthru
          _
      $region32: #{_cifar_embed_apply.1} parent=5 // pred_fallthru
        _
      %p626 = scmp.le.s32.totalorder 2, %s10
      // Predicated region
      $region41: #{_cifar_embed_apply.1} parent=5 // pred_check
        %p627 = pneg %p626
      $region42: #{_cifar_embed_apply.1} parent=5 // pred_check_branch
        %629 = sbr.rel (%p627) target = $region44
      $region43: #{_cifar_embed_apply.1} parent=5 // pred_region
        %s630 = ssub.s32 %s10, 2
        // Predicated region
        $region45: #{_cifar_embed_apply.1} parent=43 // pred_check
          %p631 = pneg %p107
        $region46: #{_cifar_embed_apply.1} parent=43 // pred_check_branch
          %633 = sbr.rel (%p631) target = $region48
        $region47: #{_cifar_embed_apply.1} parent=43 // pred_region
          %p634 = scmp.lt.s32.totalorder %s16, 1
          %s635 = scalar_select %p634, %s16, 1
          %s636 = smul.addr %s635, 8
          %s637 = smul.addr %s636, 8
          %s638 = scalar_lea.vmem %s3, %s637
        $region48: #{_cifar_embed_apply.1} parent=43 // pred_fallthru
          _
      $region44: #{_cifar_embed_apply.1} parent=5 // pred_fallthru
        _
    $region6: #{_cifar_embed_apply.1} parent=1 // loop_footer
      %s14 = sadd.s32 1, %s10
    $region7: #{_cifar_embed_apply.1} parent=1 // loop_footer_branch
      %9 = sbr.rel target = $region3
    $region8: #{_cifar_embed_apply.1} parent=1 // loop_exit
      _
    %639 = vsyncpa [#allocation3], 1
    %s640 = scalar_lea.sflag [#allocation3], 1
    %641 = vsyncpa %s640, 1

</llo_original>
